<compile_context>
chip_gen: v6e
topology: v6e:2x2x1
jax: 0.10.0
libtpu: 0.0.40
codegen_flags: <defaults>
</compile_context>

<pallas_src>
import functools

import jax
import jax.numpy as jnp
import numpy as np
from jax.experimental import pallas as pl
from jax.experimental.pallas import tpu as pltpu

# ----------------------------- config (small synthetic sizes) -----------------
BATCH = 2
SEQ = 8
HIDDEN = 32          # stands in for pretrain.config.hidden_size
NUM_CAPSULES = 4
OUT_DIM = 16
CLASS_SIZE = 4
NUM_ROUTING = 3
LANE = 128           # lane padding of the classifier head / output store


# ----------------------------------- kernel -----------------------------------
def _squash(s, eps=1e-9):
    """Capsule squash over the last axis. s: [B, out_dim]."""
    sq = jnp.sum(s * s, axis=-1, keepdims=True)                   # [B, 1]
    # sq/(1+sq) via EUP approx reciprocal; 1/sqrt via rsqrt (EUP slot).
    scale = sq * pl.reciprocal(1.0 + sq, approx=True)
    return scale * s * jax.lax.rsqrt(sq + eps)


def caps_eshgat_kernel(x_ref, wp_ref, pw_ref, pb_ref, out_ref, *,
                       batch, seq, num_capsules, out_dim, num_routing,
                       use_bf16_matmul):
    """Single-invocation kernel (no grid); everything lives in VMEM.

    x_ref : [B*S, H]          flattened last_hidden_state
    wp_ref: [H, C*OUT_DIM]    packed capsule routing weights
    pw_ref: [OUT_DIM, LANE]   classifier weight, zero-padded to 128 lanes
    pb_ref: [1, LANE]         classifier bias, padded lanes set to -1e30
    out_ref:[B, LANE]         log-softmax logits (valid lanes: [:, :class_size])
    """
    x = x_ref[...]
    wp = wp_ref[...]
    if use_bf16_matmul:
        # Right default at encoder scale on v6e/v7x; keep routing math in f32.
        x = x.astype(jnp.bfloat16)
        wp = wp.astype(jnp.bfloat16)

    # One fused MXU matmul for all capsules: [B*S, H] @ [H, C*OUT_DIM].
    priors_all = jnp.dot(x, wp, preferred_element_type=jnp.float32)

    caps_sum = jnp.zeros((batch, out_dim), jnp.float32)   # == caps_out.sum(dim=1)

    for c in range(num_capsules):                          # small static unroll
        pri = priors_all[:, c * out_dim:(c + 1) * out_dim]          # [B*S, O]
        pri = pri.reshape(batch, seq, out_dim)                       # [B, S, O]

        # r == 0: b_log is all zeros -> softmax is exactly uniform -> mean.
        s = jnp.mean(pri, axis=1)                                    # [B, O]
        v = _squash(s)                                               # [B, O]

        if num_routing > 1:
            # Routing logits kept lane-major: [B, S] with seq on the lane axis.
            b = jnp.sum(pri * v[:, None, :], axis=-1)                # [B, S]
            for r in range(1, num_routing):
                m = jnp.max(b, axis=-1, keepdims=True)               # lane reduce
                e = jnp.exp(b - m)
                probs = e / jnp.sum(e, axis=-1, keepdims=True)       # [B, S]
                s = jnp.sum(pri * probs[:, :, None], axis=1)         # [B, O]
                v = _squash(s)
                if r != num_routing - 1:
                    b = b + jnp.sum(pri * v[:, None, :], axis=-1)

        caps_sum = caps_sum + v

    # Classifier head + log_softmax, computed lane-dense (padded to 128 lanes;
    # padded bias of -1e30 contributes exp(...) == 0 to the normalizer).
    logits = jnp.dot(caps_sum, pw_ref[...],
                     preferred_element_type=jnp.float32) + pb_ref[...]   # [B, LANE]
    m = jnp.max(logits, axis=-1, keepdims=True)
    z = logits - m
    lse = jnp.log(jnp.sum(jnp.exp(z), axis=-1, keepdims=True))
    out_ref[...] = (z - lse).astype(out_ref.dtype)


# ---------------------------------- wrapper ------------------------------------
def caps_eshgat_forward(last_hidden_state, route_weights, pred_w, pred_b,
                        *, num_routing=NUM_ROUTING, use_bf16_matmul=False):
    batch, seq, hidden = last_hidden_state.shape
    num_caps, _, out_dim = route_weights.shape
    class_size = pred_w.shape[1]
    assert class_size <= LANE

    # Layout plumbing (wrapper-side): flatten batch, pack capsule weights,
    # lane-pad the classifier head so the kernel's store is lane-dense.
    x2 = last_hidden_state.reshape(batch * seq, hidden).astype(jnp.float32)
    wp = jnp.transpose(route_weights, (1, 0, 2)).reshape(hidden, num_caps * out_dim)
    pw_pad = jnp.zeros((out_dim, LANE), jnp.float32).at[:, :class_size].set(pred_w)
    pb_pad = jnp.full((1, LANE), -1e30, jnp.float32).at[0, :class_size].set(pred_b)

    kernel = functools.partial(
        caps_eshgat_kernel,
        batch=batch, seq=seq, num_capsules=num_caps, out_dim=out_dim,
        num_routing=num_routing, use_bf16_matmul=use_bf16_matmul)

    out = pl.pallas_call(
        kernel,
        out_shape=jax.ShapeDtypeStruct((batch, LANE), jnp.float32),
        in_specs=[
            pl.BlockSpec(memory_space=pltpu.MemorySpace.VMEM),
            pl.BlockSpec(memory_space=pltpu.MemorySpace.VMEM),
            pl.BlockSpec(memory_space=pltpu.MemorySpace.VMEM),
            pl.BlockSpec(memory_space=pltpu.MemorySpace.VMEM),
        ],
        out_specs=pl.BlockSpec(memory_space=pltpu.MemorySpace.VMEM),
    )(x2, wp, pw_pad, pb_pad)
    return out[:, :class_size]


# ----------------------------- pure-JAX reference -------------------------------
def caps_eshgat_reference(outs, W, pw, pb, num_routing=NUM_ROUTING, eps=1e-9):
    # priors: [num_caps, batch, seq, out_dim]
    priors = jnp.einsum('bsh,cho->cbso', outs, W)
    b_log = jnp.zeros(priors.shape[:3] + (1,), jnp.float32)
    v = None
    for r in range(num_routing):
        probs = jax.nn.softmax(b_log, axis=2)
        s = jnp.sum(probs * priors, axis=2, keepdims=True)
        sq = jnp.sum(s * s, axis=-1, keepdims=True)
        v = (sq / (1.0 + sq)) * s / jnp.sqrt(sq + eps)
        if r != num_routing - 1:
            b_log = b_log + jnp.sum(priors * v, axis=-1, keepdims=True)
    caps_out = jnp.transpose(v[:, :, 0, :], (1, 0, 2))   # [batch, num_caps, out_dim]
    pooled = caps_out.sum(axis=1)                         # caps_out.sum(dim=1)
    logits = pooled @ pw + pb
    return jax.nn.log_softmax(logits, axis=-1)


# ------------------------------------ main --------------------------------------
if __name__ == "__main__":
    key = jax.random.PRNGKey(0)
    k_x, k_w, k_pw, k_pb = jax.random.split(key, 4)

    # Encoder output stand-in (last_hidden_state of the pretrained model).
    last_hidden_state = jax.random.normal(k_x, (BATCH, SEQ, HIDDEN), jnp.float32)

    # CapsuleLayer route weights: torch.randn(num_capsules, hidden, out_dim)
    route_weights = jax.random.normal(k_w, (NUM_CAPSULES, HIDDEN, OUT_DIM), jnp.float32)

    # nn.Linear(out_dim, class_size) parameters (deterministic synthetic init).
    pred_w = jax.random.normal(k_pw, (OUT_DIM, CLASS_SIZE), jnp.float32) * 0.1
    pred_b = jax.random.normal(k_pb, (CLASS_SIZE,), jnp.float32) * 0.1

    logits = caps_eshgat_forward(last_hidden_state, route_weights, pred_w, pred_b)
    logits = jax.block_until_ready(logits)

    ref = caps_eshgat_reference(last_hidden_state, route_weights, pred_w, pred_b)
    # Tolerance accounts for the deliberate EUP approx-reciprocal / rsqrt squash.
    np.testing.assert_allclose(np.asarray(logits), np.asarray(ref),
                               rtol=1e-2, atol=1e-2)

    print("KERNEL_OK")
</pallas_src>

<mosaic_0001>
module attributes {stable_mosaic.version = 11 : i64} {
  func.func @caps_eshgat_kernel(%arg0: memref<16x32xf32, #tpu.memory_space<vmem>>, %arg1: memref<32x64xf32, #tpu.memory_space<vmem>>, %arg2: memref<16x128xf32, #tpu.memory_space<vmem>>, %arg3: memref<1x128xf32, #tpu.memory_space<vmem>>, %arg4: memref<2x128xf32, #tpu.memory_space<vmem>>) attributes {dimension_semantics = [], scalar_prefetch = 0 : i64, scratch_operands = 0 : i64, tpu.core_type = #tpu.core_type<tc>} {
    %c0 = arith.constant 0 : index
    %c0_0 = arith.constant 0 : index
    %0 = vector.load %arg0[%c0, %c0_0] : memref<16x32xf32, #tpu.memory_space<vmem>>, vector<16x32xf32>
    %c0_1 = arith.constant 0 : index
    %c0_2 = arith.constant 0 : index
    %1 = vector.load %arg1[%c0_1, %c0_2] : memref<32x64xf32, #tpu.memory_space<vmem>>, vector<32x64xf32>
    %cst = arith.constant dense<0.000000e+00> : vector<16x64xf32>
    %2 = tpu.matmul %0, %1, %cst {dimension_numbers = #tpu.dot_dimension_numbers<[1], [0], [0], [1], [0, 0, 1, 1], [], []>} : vector<16x32xf32>, vector<32x64xf32>, vector<16x64xf32> -> vector<16x64xf32>
    %cst_3 = arith.constant 0.000000e+00 : f32
    %3 = vector.broadcast %cst_3 : f32 to vector<2x16xf32>
    %4 = vector.extract_strided_slice %2 {offsets = [0, 0], sizes = [16, 16], strides = [1, 1]} : vector<16x64xf32> to vector<16x16xf32>
    %5 = vector.shape_cast %4 : vector<16x16xf32> to vector<2x8x16xf32>
    %cst_4 = arith.constant dense<0.000000e+00> : vector<2x16xf32>
    %6 = vector.multi_reduction <add>, %5, %cst_4 [1] : vector<2x8x16xf32> to vector<2x16xf32>
    %cst_5 = arith.constant 8.000000e+00 : f32
    %7 = vector.broadcast %cst_5 : f32 to vector<2x16xf32>
    %8 = arith.divf %6, %7 : vector<2x16xf32>
    %9 = arith.mulf %8, %8 : vector<2x16xf32>
    %cst_6 = arith.constant dense<0.000000e+00> : vector<2xf32>
    %10 = vector.multi_reduction <add>, %9, %cst_6 [1] : vector<2x16xf32> to vector<2xf32>
    %11 = vector.shape_cast %10 : vector<2xf32> to vector<2x1xf32>
    %cst_7 = arith.constant 1.000000e+00 : f32
    %12 = vector.broadcast %cst_7 : f32 to vector<2x1xf32>
    %13 = arith.addf %12, %11 : vector<2x1xf32>
    %14 = tpu.reciprocal %13 {approx = true} : vector<2x1xf32> -> vector<2x1xf32>
    %15 = arith.mulf %11, %14 : vector<2x1xf32>
    %16 = vector.broadcast %15 : vector<2x1xf32> to vector<2x16xf32>
    %17 = arith.mulf %16, %8 : vector<2x16xf32>
    %cst_8 = arith.constant 9.99999971E-10 : f32
    %18 = vector.broadcast %cst_8 : f32 to vector<2x1xf32>
    %19 = arith.addf %11, %18 : vector<2x1xf32>
    %20 = math.rsqrt %19 : vector<2x1xf32>
    %21 = vector.broadcast %20 : vector<2x1xf32> to vector<2x16xf32>
    %22 = arith.mulf %17, %21 : vector<2x16xf32>
    %23 = vector.shape_cast %22 : vector<2x16xf32> to vector<2x1x16xf32>
    %24 = vector.broadcast %23 : vector<2x1x16xf32> to vector<2x8x16xf32>
    %25 = arith.mulf %5, %24 : vector<2x8x16xf32>
    %cst_9 = arith.constant dense<0.000000e+00> : vector<2x8xf32>
    %26 = vector.multi_reduction <add>, %25, %cst_9 [2] : vector<2x8x16xf32> to vector<2x8xf32>
    %cst_10 = arith.constant dense<0xFF800000> : vector<2xf32>
    %27 = vector.multi_reduction <maximumf>, %26, %cst_10 [1] : vector<2x8xf32> to vector<2xf32>
    %28 = vector.shape_cast %27 : vector<2xf32> to vector<2x1xf32>
    %29 = vector.broadcast %28 : vector<2x1xf32> to vector<2x8xf32>
    %30 = arith.subf %26, %29 : vector<2x8xf32>
    %31 = math.exp %30 : vector<2x8xf32>
    %cst_11 = arith.constant dense<0.000000e+00> : vector<2xf32>
    %32 = vector.multi_reduction <add>, %31, %cst_11 [1] : vector<2x8xf32> to vector<2xf32>
    %33 = vector.shape_cast %32 : vector<2xf32> to vector<2x1xf32>
    %34 = vector.broadcast %33 : vector<2x1xf32> to vector<2x8xf32>
    %35 = arith.divf %31, %34 : vector<2x8xf32>
    %36 = vector.shape_cast %35 : vector<2x8xf32> to vector<2x8x1xf32>
    %37 = vector.broadcast %36 : vector<2x8x1xf32> to vector<2x8x16xf32>
    %38 = arith.mulf %5, %37 : vector<2x8x16xf32>
    %cst_12 = arith.constant dense<0.000000e+00> : vector<2x16xf32>
    %39 = vector.multi_reduction <add>, %38, %cst_12 [1] : vector<2x8x16xf32> to vector<2x16xf32>
    %40 = arith.mulf %39, %39 : vector<2x16xf32>
    %cst_13 = arith.constant dense<0.000000e+00> : vector<2xf32>
    %41 = vector.multi_reduction <add>, %40, %cst_13 [1] : vector<2x16xf32> to vector<2xf32>
    %42 = vector.shape_cast %41 : vector<2xf32> to vector<2x1xf32>
    %cst_14 = arith.constant 1.000000e+00 : f32
    %43 = vector.broadcast %cst_14 : f32 to vector<2x1xf32>
    %44 = arith.addf %43, %42 : vector<2x1xf32>
    %45 = tpu.reciprocal %44 {approx = true} : vector<2x1xf32> -> vector<2x1xf32>
    %46 = arith.mulf %42, %45 : vector<2x1xf32>
    %47 = vector.broadcast %46 : vector<2x1xf32> to vector<2x16xf32>
    %48 = arith.mulf %47, %39 : vector<2x16xf32>
    %cst_15 = arith.constant 9.99999971E-10 : f32
    %49 = vector.broadcast %cst_15 : f32 to vector<2x1xf32>
    %50 = arith.addf %42, %49 : vector<2x1xf32>
    %51 = math.rsqrt %50 : vector<2x1xf32>
    %52 = vector.broadcast %51 : vector<2x1xf32> to vector<2x16xf32>
    %53 = arith.mulf %48, %52 : vector<2x16xf32>
    %54 = vector.shape_cast %53 : vector<2x16xf32> to vector<2x1x16xf32>
    %55 = vector.broadcast %54 : vector<2x1x16xf32> to vector<2x8x16xf32>
    %56 = arith.mulf %5, %55 : vector<2x8x16xf32>
    %cst_16 = arith.constant dense<0.000000e+00> : vector<2x8xf32>
    %57 = vector.multi_reduction <add>, %56, %cst_16 [2] : vector<2x8x16xf32> to vector<2x8xf32>
    %58 = arith.addf %26, %57 : vector<2x8xf32>
    %cst_17 = arith.constant dense<0xFF800000> : vector<2xf32>
    %59 = vector.multi_reduction <maximumf>, %58, %cst_17 [1] : vector<2x8xf32> to vector<2xf32>
    %60 = vector.shape_cast %59 : vector<2xf32> to vector<2x1xf32>
    %61 = vector.broadcast %60 : vector<2x1xf32> to vector<2x8xf32>
    %62 = arith.subf %58, %61 : vector<2x8xf32>
    %63 = math.exp %62 : vector<2x8xf32>
    %cst_18 = arith.constant dense<0.000000e+00> : vector<2xf32>
    %64 = vector.multi_reduction <add>, %63, %cst_18 [1] : vector<2x8xf32> to vector<2xf32>
    %65 = vector.shape_cast %64 : vector<2xf32> to vector<2x1xf32>
    %66 = vector.broadcast %65 : vector<2x1xf32> to vector<2x8xf32>
    %67 = arith.divf %63, %66 : vector<2x8xf32>
    %68 = vector.shape_cast %67 : vector<2x8xf32> to vector<2x8x1xf32>
    %69 = vector.broadcast %68 : vector<2x8x1xf32> to vector<2x8x16xf32>
    %70 = arith.mulf %5, %69 : vector<2x8x16xf32>
    %cst_19 = arith.constant dense<0.000000e+00> : vector<2x16xf32>
    %71 = vector.multi_reduction <add>, %70, %cst_19 [1] : vector<2x8x16xf32> to vector<2x16xf32>
    %72 = arith.mulf %71, %71 : vector<2x16xf32>
    %cst_20 = arith.constant dense<0.000000e+00> : vector<2xf32>
    %73 = vector.multi_reduction <add>, %72, %cst_20 [1] : vector<2x16xf32> to vector<2xf32>
    %74 = vector.shape_cast %73 : vector<2xf32> to vector<2x1xf32>
    %cst_21 = arith.constant 1.000000e+00 : f32
    %75 = vector.broadcast %cst_21 : f32 to vector<2x1xf32>
    %76 = arith.addf %75, %74 : vector<2x1xf32>
    %77 = tpu.reciprocal %76 {approx = true} : vector<2x1xf32> -> vector<2x1xf32>
    %78 = arith.mulf %74, %77 : vector<2x1xf32>
    %79 = vector.broadcast %78 : vector<2x1xf32> to vector<2x16xf32>
    %80 = arith.mulf %79, %71 : vector<2x16xf32>
    %cst_22 = arith.constant 9.99999971E-10 : f32
    %81 = vector.broadcast %cst_22 : f32 to vector<2x1xf32>
    %82 = arith.addf %74, %81 : vector<2x1xf32>
    %83 = math.rsqrt %82 : vector<2x1xf32>
    %84 = vector.broadcast %83 : vector<2x1xf32> to vector<2x16xf32>
    %85 = arith.mulf %80, %84 : vector<2x16xf32>
    %86 = arith.addf %3, %85 : vector<2x16xf32>
    %87 = vector.extract_strided_slice %2 {offsets = [0, 16], sizes = [16, 16], strides = [1, 1]} : vector<16x64xf32> to vector<16x16xf32>
    %88 = vector.shape_cast %87 : vector<16x16xf32> to vector<2x8x16xf32>
    %cst_23 = arith.constant dense<0.000000e+00> : vector<2x16xf32>
    %89 = vector.multi_reduction <add>, %88, %cst_23 [1] : vector<2x8x16xf32> to vector<2x16xf32>
    %cst_24 = arith.constant 8.000000e+00 : f32
    %90 = vector.broadcast %cst_24 : f32 to vector<2x16xf32>
    %91 = arith.divf %89, %90 : vector<2x16xf32>
    %92 = arith.mulf %91, %91 : vector<2x16xf32>
    %cst_25 = arith.constant dense<0.000000e+00> : vector<2xf32>
    %93 = vector.multi_reduction <add>, %92, %cst_25 [1] : vector<2x16xf32> to vector<2xf32>
    %94 = vector.shape_cast %93 : vector<2xf32> to vector<2x1xf32>
    %cst_26 = arith.constant 1.000000e+00 : f32
    %95 = vector.broadcast %cst_26 : f32 to vector<2x1xf32>
    %96 = arith.addf %95, %94 : vector<2x1xf32>
    %97 = tpu.reciprocal %96 {approx = true} : vector<2x1xf32> -> vector<2x1xf32>
    %98 = arith.mulf %94, %97 : vector<2x1xf32>
    %99 = vector.broadcast %98 : vector<2x1xf32> to vector<2x16xf32>
    %100 = arith.mulf %99, %91 : vector<2x16xf32>
    %cst_27 = arith.constant 9.99999971E-10 : f32
    %101 = vector.broadcast %cst_27 : f32 to vector<2x1xf32>
    %102 = arith.addf %94, %101 : vector<2x1xf32>
    %103 = math.rsqrt %102 : vector<2x1xf32>
    %104 = vector.broadcast %103 : vector<2x1xf32> to vector<2x16xf32>
    %105 = arith.mulf %100, %104 : vector<2x16xf32>
    %106 = vector.shape_cast %105 : vector<2x16xf32> to vector<2x1x16xf32>
    %107 = vector.broadcast %106 : vector<2x1x16xf32> to vector<2x8x16xf32>
    %108 = arith.mulf %88, %107 : vector<2x8x16xf32>
    %cst_28 = arith.constant dense<0.000000e+00> : vector<2x8xf32>
    %109 = vector.multi_reduction <add>, %108, %cst_28 [2] : vector<2x8x16xf32> to vector<2x8xf32>
    %cst_29 = arith.constant dense<0xFF800000> : vector<2xf32>
    %110 = vector.multi_reduction <maximumf>, %109, %cst_29 [1] : vector<2x8xf32> to vector<2xf32>
    %111 = vector.shape_cast %110 : vector<2xf32> to vector<2x1xf32>
    %112 = vector.broadcast %111 : vector<2x1xf32> to vector<2x8xf32>
    %113 = arith.subf %109, %112 : vector<2x8xf32>
    %114 = math.exp %113 : vector<2x8xf32>
    %cst_30 = arith.constant dense<0.000000e+00> : vector<2xf32>
    %115 = vector.multi_reduction <add>, %114, %cst_30 [1] : vector<2x8xf32> to vector<2xf32>
    %116 = vector.shape_cast %115 : vector<2xf32> to vector<2x1xf32>
    %117 = vector.broadcast %116 : vector<2x1xf32> to vector<2x8xf32>
    %118 = arith.divf %114, %117 : vector<2x8xf32>
    %119 = vector.shape_cast %118 : vector<2x8xf32> to vector<2x8x1xf32>
    %120 = vector.broadcast %119 : vector<2x8x1xf32> to vector<2x8x16xf32>
    %121 = arith.mulf %88, %120 : vector<2x8x16xf32>
    %cst_31 = arith.constant dense<0.000000e+00> : vector<2x16xf32>
    %122 = vector.multi_reduction <add>, %121, %cst_31 [1] : vector<2x8x16xf32> to vector<2x16xf32>
    %123 = arith.mulf %122, %122 : vector<2x16xf32>
    %cst_32 = arith.constant dense<0.000000e+00> : vector<2xf32>
    %124 = vector.multi_reduction <add>, %123, %cst_32 [1] : vector<2x16xf32> to vector<2xf32>
    %125 = vector.shape_cast %124 : vector<2xf32> to vector<2x1xf32>
    %cst_33 = arith.constant 1.000000e+00 : f32
    %126 = vector.broadcast %cst_33 : f32 to vector<2x1xf32>
    %127 = arith.addf %126, %125 : vector<2x1xf32>
    %128 = tpu.reciprocal %127 {approx = true} : vector<2x1xf32> -> vector<2x1xf32>
    %129 = arith.mulf %125, %128 : vector<2x1xf32>
    %130 = vector.broadcast %129 : vector<2x1xf32> to vector<2x16xf32>
    %131 = arith.mulf %130, %122 : vector<2x16xf32>
    %cst_34 = arith.constant 9.99999971E-10 : f32
    %132 = vector.broadcast %cst_34 : f32 to vector<2x1xf32>
    %133 = arith.addf %125, %132 : vector<2x1xf32>
    %134 = math.rsqrt %133 : vector<2x1xf32>
    %135 = vector.broadcast %134 : vector<2x1xf32> to vector<2x16xf32>
    %136 = arith.mulf %131, %135 : vector<2x16xf32>
    %137 = vector.shape_cast %136 : vector<2x16xf32> to vector<2x1x16xf32>
    %138 = vector.broadcast %137 : vector<2x1x16xf32> to vector<2x8x16xf32>
    %139 = arith.mulf %88, %138 : vector<2x8x16xf32>
    %cst_35 = arith.constant dense<0.000000e+00> : vector<2x8xf32>
    %140 = vector.multi_reduction <add>, %139, %cst_35 [2] : vector<2x8x16xf32> to vector<2x8xf32>
    %141 = arith.addf %109, %140 : vector<2x8xf32>
    %cst_36 = arith.constant dense<0xFF800000> : vector<2xf32>
    %142 = vector.multi_reduction <maximumf>, %141, %cst_36 [1] : vector<2x8xf32> to vector<2xf32>
    %143 = vector.shape_cast %142 : vector<2xf32> to vector<2x1xf32>
    %144 = vector.broadcast %143 : vector<2x1xf32> to vector<2x8xf32>
    %145 = arith.subf %141, %144 : vector<2x8xf32>
    %146 = math.exp %145 : vector<2x8xf32>
    %cst_37 = arith.constant dense<0.000000e+00> : vector<2xf32>
    %147 = vector.multi_reduction <add>, %146, %cst_37 [1] : vector<2x8xf32> to vector<2xf32>
    %148 = vector.shape_cast %147 : vector<2xf32> to vector<2x1xf32>
    %149 = vector.broadcast %148 : vector<2x1xf32> to vector<2x8xf32>
    %150 = arith.divf %146, %149 : vector<2x8xf32>
    %151 = vector.shape_cast %150 : vector<2x8xf32> to vector<2x8x1xf32>
    %152 = vector.broadcast %151 : vector<2x8x1xf32> to vector<2x8x16xf32>
    %153 = arith.mulf %88, %152 : vector<2x8x16xf32>
    %cst_38 = arith.constant dense<0.000000e+00> : vector<2x16xf32>
    %154 = vector.multi_reduction <add>, %153, %cst_38 [1] : vector<2x8x16xf32> to vector<2x16xf32>
    %155 = arith.mulf %154, %154 : vector<2x16xf32>
    %cst_39 = arith.constant dense<0.000000e+00> : vector<2xf32>
    %156 = vector.multi_reduction <add>, %155, %cst_39 [1] : vector<2x16xf32> to vector<2xf32>
    %157 = vector.shape_cast %156 : vector<2xf32> to vector<2x1xf32>
    %cst_40 = arith.constant 1.000000e+00 : f32
    %158 = vector.broadcast %cst_40 : f32 to vector<2x1xf32>
    %159 = arith.addf %158, %157 : vector<2x1xf32>
    %160 = tpu.reciprocal %159 {approx = true} : vector<2x1xf32> -> vector<2x1xf32>
    %161 = arith.mulf %157, %160 : vector<2x1xf32>
    %162 = vector.broadcast %161 : vector<2x1xf32> to vector<2x16xf32>
    %163 = arith.mulf %162, %154 : vector<2x16xf32>
    %cst_41 = arith.constant 9.99999971E-10 : f32
    %164 = vector.broadcast %cst_41 : f32 to vector<2x1xf32>
    %165 = arith.addf %157, %164 : vector<2x1xf32>
    %166 = math.rsqrt %165 : vector<2x1xf32>
    %167 = vector.broadcast %166 : vector<2x1xf32> to vector<2x16xf32>
    %168 = arith.mulf %163, %167 : vector<2x16xf32>
    %169 = arith.addf %86, %168 : vector<2x16xf32>
    %170 = vector.extract_strided_slice %2 {offsets = [0, 32], sizes = [16, 16], strides = [1, 1]} : vector<16x64xf32> to vector<16x16xf32>
    %171 = vector.shape_cast %170 : vector<16x16xf32> to vector<2x8x16xf32>
    %cst_42 = arith.constant dense<0.000000e+00> : vector<2x16xf32>
    %172 = vector.multi_reduction <add>, %171, %cst_42 [1] : vector<2x8x16xf32> to vector<2x16xf32>
    %cst_43 = arith.constant 8.000000e+00 : f32
    %173 = vector.broadcast %cst_43 : f32 to vector<2x16xf32>
    %174 = arith.divf %172, %173 : vector<2x16xf32>
    %175 = arith.mulf %174, %174 : vector<2x16xf32>
    %cst_44 = arith.constant dense<0.000000e+00> : vector<2xf32>
    %176 = vector.multi_reduction <add>, %175, %cst_44 [1] : vector<2x16xf32> to vector<2xf32>
    %177 = vector.shape_cast %176 : vector<2xf32> to vector<2x1xf32>
    %cst_45 = arith.constant 1.000000e+00 : f32
    %178 = vector.broadcast %cst_45 : f32 to vector<2x1xf32>
    %179 = arith.addf %178, %177 : vector<2x1xf32>
    %180 = tpu.reciprocal %179 {approx = true} : vector<2x1xf32> -> vector<2x1xf32>
    %181 = arith.mulf %177, %180 : vector<2x1xf32>
    %182 = vector.broadcast %181 : vector<2x1xf32> to vector<2x16xf32>
    %183 = arith.mulf %182, %174 : vector<2x16xf32>
    %cst_46 = arith.constant 9.99999971E-10 : f32
    %184 = vector.broadcast %cst_46 : f32 to vector<2x1xf32>
    %185 = arith.addf %177, %184 : vector<2x1xf32>
    %186 = math.rsqrt %185 : vector<2x1xf32>
    %187 = vector.broadcast %186 : vector<2x1xf32> to vector<2x16xf32>
    %188 = arith.mulf %183, %187 : vector<2x16xf32>
    %189 = vector.shape_cast %188 : vector<2x16xf32> to vector<2x1x16xf32>
    %190 = vector.broadcast %189 : vector<2x1x16xf32> to vector<2x8x16xf32>
    %191 = arith.mulf %171, %190 : vector<2x8x16xf32>
    %cst_47 = arith.constant dense<0.000000e+00> : vector<2x8xf32>
    %192 = vector.multi_reduction <add>, %191, %cst_47 [2] : vector<2x8x16xf32> to vector<2x8xf32>
    %cst_48 = arith.constant dense<0xFF800000> : vector<2xf32>
    %193 = vector.multi_reduction <maximumf>, %192, %cst_48 [1] : vector<2x8xf32> to vector<2xf32>
    %194 = vector.shape_cast %193 : vector<2xf32> to vector<2x1xf32>
    %195 = vector.broadcast %194 : vector<2x1xf32> to vector<2x8xf32>
    %196 = arith.subf %192, %195 : vector<2x8xf32>
    %197 = math.exp %196 : vector<2x8xf32>
    %cst_49 = arith.constant dense<0.000000e+00> : vector<2xf32>
    %198 = vector.multi_reduction <add>, %197, %cst_49 [1] : vector<2x8xf32> to vector<2xf32>
    %199 = vector.shape_cast %198 : vector<2xf32> to vector<2x1xf32>
    %200 = vector.broadcast %199 : vector<2x1xf32> to vector<2x8xf32>
    %201 = arith.divf %197, %200 : vector<2x8xf32>
    %202 = vector.shape_cast %201 : vector<2x8xf32> to vector<2x8x1xf32>
    %203 = vector.broadcast %202 : vector<2x8x1xf32> to vector<2x8x16xf32>
    %204 = arith.mulf %171, %203 : vector<2x8x16xf32>
    %cst_50 = arith.constant dense<0.000000e+00> : vector<2x16xf32>
    %205 = vector.multi_reduction <add>, %204, %cst_50 [1] : vector<2x8x16xf32> to vector<2x16xf32>
    %206 = arith.mulf %205, %205 : vector<2x16xf32>
    %cst_51 = arith.constant dense<0.000000e+00> : vector<2xf32>
    %207 = vector.multi_reduction <add>, %206, %cst_51 [1] : vector<2x16xf32> to vector<2xf32>
    %208 = vector.shape_cast %207 : vector<2xf32> to vector<2x1xf32>
    %cst_52 = arith.constant 1.000000e+00 : f32
    %209 = vector.broadcast %cst_52 : f32 to vector<2x1xf32>
    %210 = arith.addf %209, %208 : vector<2x1xf32>
    %211 = tpu.reciprocal %210 {approx = true} : vector<2x1xf32> -> vector<2x1xf32>
    %212 = arith.mulf %208, %211 : vector<2x1xf32>
    %213 = vector.broadcast %212 : vector<2x1xf32> to vector<2x16xf32>
    %214 = arith.mulf %213, %205 : vector<2x16xf32>
    %cst_53 = arith.constant 9.99999971E-10 : f32
    %215 = vector.broadcast %cst_53 : f32 to vector<2x1xf32>
    %216 = arith.addf %208, %215 : vector<2x1xf32>
    %217 = math.rsqrt %216 : vector<2x1xf32>
    %218 = vector.broadcast %217 : vector<2x1xf32> to vector<2x16xf32>
    %219 = arith.mulf %214, %218 : vector<2x16xf32>
    %220 = vector.shape_cast %219 : vector<2x16xf32> to vector<2x1x16xf32>
    %221 = vector.broadcast %220 : vector<2x1x16xf32> to vector<2x8x16xf32>
    %222 = arith.mulf %171, %221 : vector<2x8x16xf32>
    %cst_54 = arith.constant dense<0.000000e+00> : vector<2x8xf32>
    %223 = vector.multi_reduction <add>, %222, %cst_54 [2] : vector<2x8x16xf32> to vector<2x8xf32>
    %224 = arith.addf %192, %223 : vector<2x8xf32>
    %cst_55 = arith.constant dense<0xFF800000> : vector<2xf32>
    %225 = vector.multi_reduction <maximumf>, %224, %cst_55 [1] : vector<2x8xf32> to vector<2xf32>
    %226 = vector.shape_cast %225 : vector<2xf32> to vector<2x1xf32>
    %227 = vector.broadcast %226 : vector<2x1xf32> to vector<2x8xf32>
    %228 = arith.subf %224, %227 : vector<2x8xf32>
    %229 = math.exp %228 : vector<2x8xf32>
    %cst_56 = arith.constant dense<0.000000e+00> : vector<2xf32>
    %230 = vector.multi_reduction <add>, %229, %cst_56 [1] : vector<2x8xf32> to vector<2xf32>
    %231 = vector.shape_cast %230 : vector<2xf32> to vector<2x1xf32>
    %232 = vector.broadcast %231 : vector<2x1xf32> to vector<2x8xf32>
    %233 = arith.divf %229, %232 : vector<2x8xf32>
    %234 = vector.shape_cast %233 : vector<2x8xf32> to vector<2x8x1xf32>
    %235 = vector.broadcast %234 : vector<2x8x1xf32> to vector<2x8x16xf32>
    %236 = arith.mulf %171, %235 : vector<2x8x16xf32>
    %cst_57 = arith.constant dense<0.000000e+00> : vector<2x16xf32>
    %237 = vector.multi_reduction <add>, %236, %cst_57 [1] : vector<2x8x16xf32> to vector<2x16xf32>
    %238 = arith.mulf %237, %237 : vector<2x16xf32>
    %cst_58 = arith.constant dense<0.000000e+00> : vector<2xf32>
    %239 = vector.multi_reduction <add>, %238, %cst_58 [1] : vector<2x16xf32> to vector<2xf32>
    %240 = vector.shape_cast %239 : vector<2xf32> to vector<2x1xf32>
    %cst_59 = arith.constant 1.000000e+00 : f32
    %241 = vector.broadcast %cst_59 : f32 to vector<2x1xf32>
    %242 = arith.addf %241, %240 : vector<2x1xf32>
    %243 = tpu.reciprocal %242 {approx = true} : vector<2x1xf32> -> vector<2x1xf32>
    %244 = arith.mulf %240, %243 : vector<2x1xf32>
    %245 = vector.broadcast %244 : vector<2x1xf32> to vector<2x16xf32>
    %246 = arith.mulf %245, %237 : vector<2x16xf32>
    %cst_60 = arith.constant 9.99999971E-10 : f32
    %247 = vector.broadcast %cst_60 : f32 to vector<2x1xf32>
    %248 = arith.addf %240, %247 : vector<2x1xf32>
    %249 = math.rsqrt %248 : vector<2x1xf32>
    %250 = vector.broadcast %249 : vector<2x1xf32> to vector<2x16xf32>
    %251 = arith.mulf %246, %250 : vector<2x16xf32>
    %252 = arith.addf %169, %251 : vector<2x16xf32>
    %253 = vector.extract_strided_slice %2 {offsets = [0, 48], sizes = [16, 16], strides = [1, 1]} : vector<16x64xf32> to vector<16x16xf32>
    %254 = vector.shape_cast %253 : vector<16x16xf32> to vector<2x8x16xf32>
    %cst_61 = arith.constant dense<0.000000e+00> : vector<2x16xf32>
    %255 = vector.multi_reduction <add>, %254, %cst_61 [1] : vector<2x8x16xf32> to vector<2x16xf32>
    %cst_62 = arith.constant 8.000000e+00 : f32
    %256 = vector.broadcast %cst_62 : f32 to vector<2x16xf32>
    %257 = arith.divf %255, %256 : vector<2x16xf32>
    %258 = arith.mulf %257, %257 : vector<2x16xf32>
    %cst_63 = arith.constant dense<0.000000e+00> : vector<2xf32>
    %259 = vector.multi_reduction <add>, %258, %cst_63 [1] : vector<2x16xf32> to vector<2xf32>
    %260 = vector.shape_cast %259 : vector<2xf32> to vector<2x1xf32>
    %cst_64 = arith.constant 1.000000e+00 : f32
    %261 = vector.broadcast %cst_64 : f32 to vector<2x1xf32>
    %262 = arith.addf %261, %260 : vector<2x1xf32>
    %263 = tpu.reciprocal %262 {approx = true} : vector<2x1xf32> -> vector<2x1xf32>
    %264 = arith.mulf %260, %263 : vector<2x1xf32>
    %265 = vector.broadcast %264 : vector<2x1xf32> to vector<2x16xf32>
    %266 = arith.mulf %265, %257 : vector<2x16xf32>
    %cst_65 = arith.constant 9.99999971E-10 : f32
    %267 = vector.broadcast %cst_65 : f32 to vector<2x1xf32>
    %268 = arith.addf %260, %267 : vector<2x1xf32>
    %269 = math.rsqrt %268 : vector<2x1xf32>
    %270 = vector.broadcast %269 : vector<2x1xf32> to vector<2x16xf32>
    %271 = arith.mulf %266, %270 : vector<2x16xf32>
    %272 = vector.shape_cast %271 : vector<2x16xf32> to vector<2x1x16xf32>
    %273 = vector.broadcast %272 : vector<2x1x16xf32> to vector<2x8x16xf32>
    %274 = arith.mulf %254, %273 : vector<2x8x16xf32>
    %cst_66 = arith.constant dense<0.000000e+00> : vector<2x8xf32>
    %275 = vector.multi_reduction <add>, %274, %cst_66 [2] : vector<2x8x16xf32> to vector<2x8xf32>
    %cst_67 = arith.constant dense<0xFF800000> : vector<2xf32>
    %276 = vector.multi_reduction <maximumf>, %275, %cst_67 [1] : vector<2x8xf32> to vector<2xf32>
    %277 = vector.shape_cast %276 : vector<2xf32> to vector<2x1xf32>
    %278 = vector.broadcast %277 : vector<2x1xf32> to vector<2x8xf32>
    %279 = arith.subf %275, %278 : vector<2x8xf32>
    %280 = math.exp %279 : vector<2x8xf32>
    %cst_68 = arith.constant dense<0.000000e+00> : vector<2xf32>
    %281 = vector.multi_reduction <add>, %280, %cst_68 [1] : vector<2x8xf32> to vector<2xf32>
    %282 = vector.shape_cast %281 : vector<2xf32> to vector<2x1xf32>
    %283 = vector.broadcast %282 : vector<2x1xf32> to vector<2x8xf32>
    %284 = arith.divf %280, %283 : vector<2x8xf32>
    %285 = vector.shape_cast %284 : vector<2x8xf32> to vector<2x8x1xf32>
    %286 = vector.broadcast %285 : vector<2x8x1xf32> to vector<2x8x16xf32>
    %287 = arith.mulf %254, %286 : vector<2x8x16xf32>
    %cst_69 = arith.constant dense<0.000000e+00> : vector<2x16xf32>
    %288 = vector.multi_reduction <add>, %287, %cst_69 [1] : vector<2x8x16xf32> to vector<2x16xf32>
    %289 = arith.mulf %288, %288 : vector<2x16xf32>
    %cst_70 = arith.constant dense<0.000000e+00> : vector<2xf32>
    %290 = vector.multi_reduction <add>, %289, %cst_70 [1] : vector<2x16xf32> to vector<2xf32>
    %291 = vector.shape_cast %290 : vector<2xf32> to vector<2x1xf32>
    %cst_71 = arith.constant 1.000000e+00 : f32
    %292 = vector.broadcast %cst_71 : f32 to vector<2x1xf32>
    %293 = arith.addf %292, %291 : vector<2x1xf32>
    %294 = tpu.reciprocal %293 {approx = true} : vector<2x1xf32> -> vector<2x1xf32>
    %295 = arith.mulf %291, %294 : vector<2x1xf32>
    %296 = vector.broadcast %295 : vector<2x1xf32> to vector<2x16xf32>
    %297 = arith.mulf %296, %288 : vector<2x16xf32>
    %cst_72 = arith.constant 9.99999971E-10 : f32
    %298 = vector.broadcast %cst_72 : f32 to vector<2x1xf32>
    %299 = arith.addf %291, %298 : vector<2x1xf32>
    %300 = math.rsqrt %299 : vector<2x1xf32>
    %301 = vector.broadcast %300 : vector<2x1xf32> to vector<2x16xf32>
    %302 = arith.mulf %297, %301 : vector<2x16xf32>
    %303 = vector.shape_cast %302 : vector<2x16xf32> to vector<2x1x16xf32>
    %304 = vector.broadcast %303 : vector<2x1x16xf32> to vector<2x8x16xf32>
    %305 = arith.mulf %254, %304 : vector<2x8x16xf32>
    %cst_73 = arith.constant dense<0.000000e+00> : vector<2x8xf32>
    %306 = vector.multi_reduction <add>, %305, %cst_73 [2] : vector<2x8x16xf32> to vector<2x8xf32>
    %307 = arith.addf %275, %306 : vector<2x8xf32>
    %cst_74 = arith.constant dense<0xFF800000> : vector<2xf32>
    %308 = vector.multi_reduction <maximumf>, %307, %cst_74 [1] : vector<2x8xf32> to vector<2xf32>
    %309 = vector.shape_cast %308 : vector<2xf32> to vector<2x1xf32>
    %310 = vector.broadcast %309 : vector<2x1xf32> to vector<2x8xf32>
    %311 = arith.subf %307, %310 : vector<2x8xf32>
    %312 = math.exp %311 : vector<2x8xf32>
    %cst_75 = arith.constant dense<0.000000e+00> : vector<2xf32>
    %313 = vector.multi_reduction <add>, %312, %cst_75 [1] : vector<2x8xf32> to vector<2xf32>
    %314 = vector.shape_cast %313 : vector<2xf32> to vector<2x1xf32>
    %315 = vector.broadcast %314 : vector<2x1xf32> to vector<2x8xf32>
    %316 = arith.divf %312, %315 : vector<2x8xf32>
    %317 = vector.shape_cast %316 : vector<2x8xf32> to vector<2x8x1xf32>
    %318 = vector.broadcast %317 : vector<2x8x1xf32> to vector<2x8x16xf32>
    %319 = arith.mulf %254, %318 : vector<2x8x16xf32>
    %cst_76 = arith.constant dense<0.000000e+00> : vector<2x16xf32>
    %320 = vector.multi_reduction <add>, %319, %cst_76 [1] : vector<2x8x16xf32> to vector<2x16xf32>
    %321 = arith.mulf %320, %320 : vector<2x16xf32>
    %cst_77 = arith.constant dense<0.000000e+00> : vector<2xf32>
    %322 = vector.multi_reduction <add>, %321, %cst_77 [1] : vector<2x16xf32> to vector<2xf32>
    %323 = vector.shape_cast %322 : vector<2xf32> to vector<2x1xf32>
    %cst_78 = arith.constant 1.000000e+00 : f32
    %324 = vector.broadcast %cst_78 : f32 to vector<2x1xf32>
    %325 = arith.addf %324, %323 : vector<2x1xf32>
    %326 = tpu.reciprocal %325 {approx = true} : vector<2x1xf32> -> vector<2x1xf32>
    %327 = arith.mulf %323, %326 : vector<2x1xf32>
    %328 = vector.broadcast %327 : vector<2x1xf32> to vector<2x16xf32>
    %329 = arith.mulf %328, %320 : vector<2x16xf32>
    %cst_79 = arith.constant 9.99999971E-10 : f32
    %330 = vector.broadcast %cst_79 : f32 to vector<2x1xf32>
    %331 = arith.addf %323, %330 : vector<2x1xf32>
    %332 = math.rsqrt %331 : vector<2x1xf32>
    %333 = vector.broadcast %332 : vector<2x1xf32> to vector<2x16xf32>
    %334 = arith.mulf %329, %333 : vector<2x16xf32>
    %335 = arith.addf %252, %334 : vector<2x16xf32>
    %c0_80 = arith.constant 0 : index
    %c0_81 = arith.constant 0 : index
    %336 = vector.load %arg2[%c0_80, %c0_81] : memref<16x128xf32, #tpu.memory_space<vmem>>, vector<16x128xf32>
    %cst_82 = arith.constant dense<0.000000e+00> : vector<2x128xf32>
    %337 = tpu.matmul %335, %336, %cst_82 {dimension_numbers = #tpu.dot_dimension_numbers<[1], [0], [0], [1], [0, 0, 1, 1], [], []>} : vector<2x16xf32>, vector<16x128xf32>, vector<2x128xf32> -> vector<2x128xf32>
    %c0_83 = arith.constant 0 : index
    %c0_84 = arith.constant 0 : index
    %338 = vector.load %arg3[%c0_83, %c0_84] : memref<1x128xf32, #tpu.memory_space<vmem>>, vector<1x128xf32>
    %339 = vector.broadcast %338 : vector<1x128xf32> to vector<2x128xf32>
    %340 = arith.addf %337, %339 : vector<2x128xf32>
    %cst_85 = arith.constant dense<0xFF800000> : vector<2xf32>
    %341 = vector.multi_reduction <maximumf>, %340, %cst_85 [1] : vector<2x128xf32> to vector<2xf32>
    %342 = vector.shape_cast %341 : vector<2xf32> to vector<2x1xf32>
    %343 = vector.broadcast %342 : vector<2x1xf32> to vector<2x128xf32>
    %344 = arith.subf %340, %343 : vector<2x128xf32>
    %345 = math.exp %344 : vector<2x128xf32>
    %cst_86 = arith.constant dense<0.000000e+00> : vector<2xf32>
    %346 = vector.multi_reduction <add>, %345, %cst_86 [1] : vector<2x128xf32> to vector<2xf32>
    %347 = vector.shape_cast %346 : vector<2xf32> to vector<2x1xf32>
    %348 = math.log %347 : vector<2x1xf32>
    %349 = vector.broadcast %348 : vector<2x1xf32> to vector<2x128xf32>
    %350 = arith.subf %344, %349 : vector<2x128xf32>
    %c0_87 = arith.constant 0 : index
    %c0_88 = arith.constant 0 : index
    %351 = vector.load %arg4[%c0_87, %c0_88] : memref<2x128xf32, #tpu.memory_space<vmem>>, vector<2x128xf32>
    tpu.vector_store %arg4[%c0_87, %c0_88], %350 {strides = array<i32>} : memref<2x128xf32, #tpu.memory_space<vmem>>, vector<2x128xf32>,
    return
  }
}

</mosaic_0001>

<llo_original>
// kernel: tpu_custom_call.1
$region0: #{tpu_custom_call.1}
  #allocation0 [shape = 'u32[]', space=smem, size = 0x4, offset = 0x4, fixed_abs, tag = 'smem constant byte address 0x4 - core index']
  #allocation1 [shape = 'u32[144,128]{1,0:T(1,128)}', space=vmem, size = 0x12000, scoped, tag = 'internal scratch']
  %s0 = inlined_call_operand.hbm [shape: f32[16,32], index: 0, kind: input, shape index: {}]
  %s1 = inlined_call_operand.hbm [shape: f32[32,64], index: 1, kind: input, shape index: {}]
  %s2 = inlined_call_operand.hbm [shape: f32[16,128], index: 2, kind: input, shape index: {}]
  %s3 = inlined_call_operand.vmem [shape: f32[1,128], index: 3, kind: input, shape index: {}]
  %s4 = inlined_call_operand.hbm [shape: f32[2,128], index: 4, kind: output, shape index: {}]
  %s5 = sld [smem:[#allocation0]]
  $region38: #{tpu_custom_call.1} parent=0
    _
  %s7 = ssub.s32 1, %s5
  %s8 = scalar_select 0, %s7, %s5
  $region1: #{tpu_custom_call.1} parent=0
    #allocation2 [shape = 'u8[8192]{0}', space=vmem, size = 0x2000, scoped, tag = 'input window, operand 0, single buffered']
    #allocation3 [shape = 's32[1]{0}', space=sflag, size = 0x4, scoped, tag = 'scoped memory for tpu_custom_call.1']
    #allocation4 [shape = 's32[1]{0}', space=sflag, size = 0x4, scoped, tag = 'scoped memory for tpu_custom_call.1']
    #allocation5 [shape = 'u8[16384]{0}', space=vmem, size = 0x4000, scoped, tag = 'input window, operand 1, single buffered']
    #allocation6 [shape = 's32[1]{0}', space=sflag, size = 0x4, scoped, tag = 'scoped memory for tpu_custom_call.1']
    #allocation7 [shape = 'u8[8192]{0}', space=vmem, size = 0x2000, scoped, tag = 'input window, operand 2, single buffered']
    #allocation8 [shape = 'u8[1024]{0}', space=vmem, size = 0x400, scoped, tag = 'output window, operand 0, single buffered']
    %9 = vsyncpa [#allocation3], 0
    %10 = vsyncpa [#allocation6], 0
    %11 = vsyncpa [#allocation4], 0
    // Predicated region
    $region2: #{tpu_custom_call.1} parent=1 // pred_check
      _
    $region3: #{tpu_custom_call.1} parent=1 // pred_check_branch
      %13 = sbr.rel (0) target = $region5
    $region4: #{tpu_custom_call.1} parent=1 // pred_region
      %s15 = ssub.s32 256, 256
      %16 = vsyncadd [#allocation3], %s15
      %s17 = sshll.u32 [#allocation2], 4
      %s18 = int_to_ptr.vmem [resolvable:$true] %s17
      %23 = dma.hbm_to_vmem [thread:$0]  %s0, 256, %s18, [#allocation3], 128, 128, 8
    $region5: #{tpu_custom_call.1} parent=1 // pred_fallthru
      _
    // Predicated region
    $region6: #{tpu_custom_call.1} parent=1 // pred_check
      _
    $region7: #{tpu_custom_call.1} parent=1 // pred_check_branch
      %25 = sbr.rel (0) target = $region9
    $region8: #{tpu_custom_call.1} parent=1 // pred_region
      %s27 = ssub.s32 512, 512
      %28 = vsyncadd [#allocation6], %s27
      %s29 = sshll.u32 [#allocation5], 4
      %s30 = int_to_ptr.vmem [resolvable:$true] %s29
      %35 = dma.hbm_to_vmem [thread:$0]  %s1, 512, %s30, [#allocation6], 128, 128, 8
    $region9: #{tpu_custom_call.1} parent=1 // pred_fallthru
      _
    // Predicated region
    $region10: #{tpu_custom_call.1} parent=1 // pred_check
      _
    $region11: #{tpu_custom_call.1} parent=1 // pred_check_branch
      %37 = sbr.rel (0) target = $region13
    $region12: #{tpu_custom_call.1} parent=1 // pred_region
      %s39 = ssub.s32 256, 256
      %40 = vsyncadd [#allocation6], %s39
      %s41 = sshll.u32 [#allocation7], 4
      %s42 = int_to_ptr.vmem [resolvable:$true] %s41
      %47 = dma.hbm_to_vmem [thread:$0]  %s2, 256, %s42, [#allocation6], 128, 128, 8
    $region13: #{tpu_custom_call.1} parent=1 // pred_fallthru
      _
    // Predicated region
    $region14: #{tpu_custom_call.1} parent=1 // pred_check
      _
    $region15: #{tpu_custom_call.1} parent=1 // pred_check_branch
      %49 = sbr.rel (0) target = $region17
    $region16: #{tpu_custom_call.1} parent=1 // pred_region
      _
    $region17: #{tpu_custom_call.1} parent=1 // pred_fallthru
      _
    // Predicated region
    $region18: #{tpu_custom_call.1} parent=1 // pred_check
      _
    $region19: #{tpu_custom_call.1} parent=1 // pred_check_branch
      %51 = sbr.rel (0) target = $region21
    $region20: #{tpu_custom_call.1} parent=1 // pred_region
      %52 = dma.done [#allocation3], 256
    $region21: #{tpu_custom_call.1} parent=1 // pred_fallthru
      _
    // Predicated region
    $region22: #{tpu_custom_call.1} parent=1 // pred_check
      _
    $region23: #{tpu_custom_call.1} parent=1 // pred_check_branch
      %54 = sbr.rel (0) target = $region25
    $region24: #{tpu_custom_call.1} parent=1 // pred_region
      %55 = dma.done [#allocation6], 512
    $region25: #{tpu_custom_call.1} parent=1 // pred_fallthru
      _
    // Predicated region
    $region26: #{tpu_custom_call.1} parent=1 // pred_check
      _
    $region27: #{tpu_custom_call.1} parent=1 // pred_check_branch
      %57 = sbr.rel (0) target = $region29
    $region28: #{tpu_custom_call.1} parent=1 // pred_region
      %58 = dma.done [#allocation6], 256
    $region29: #{tpu_custom_call.1} parent=1 // pred_fallthru
      _
    %v59 = vld [vmem:[#allocation2] sm:$0xff]
    %v60 = vld [vmem:[#allocation2 + $0x8] sm:$0xff]
    %v61 = vld [vmem:[#allocation5] sm:$0xff]
    %v62 = vld [vmem:[#allocation5 + $0x8] sm:$0xff]
    %v63 = vld [vmem:[#allocation5 + $0x10] sm:$0xff]
    %v64 = vld [vmem:[#allocation5 + $0x18] sm:$0xff]
    %vm65 = vcmask 261120
    %v67 = vsel %vm65, %v59, 0
    %v70 = vsel %vm65, %v60, 0
    %72 = vmatprep.subr.mxu0 0.0
    %73 = vmatpush1.msra.mxu0 0.0
    %74 = vmatprep.subr.mxu0 0.0
    %75 = vmatpush1.msra.mxu0 0.0
    %76 = vmatprep.subr.mxu0 0.0
    %77 = vmatpush1.msra.mxu0 0.0
    %78 = vmatprep.subr.mxu0 0.0
    %79 = vmatpush1.msra.mxu0 0.0
    %80 = vmatprep.subr.mxu0 0.0
    %81 = vmatpush1.msra.mxu0 0.0
    %82 = vmatprep.subr.mxu0 0.0
    %83 = vmatpush1.msra.mxu0 0.0
    %84 = vmatprep.subr.mxu0 0.0
    %85 = vmatpush1.msra.mxu0 0.0
    %86 = vmatprep.subr.mxu0 0.0
    %87 = vmatpush1.msra.mxu0 0.0
    %88 = vmatprep.subr.mxu0 0.0
    %89 = vmatpush1.msra.mxu0 0.0
    %90 = vmatprep.subr.mxu0 0.0
    %91 = vmatpush1.msra.mxu0 0.0
    %92 = vmatprep.subr.mxu0 0.0
    %93 = vmatpush1.msra.mxu0 0.0
    %94 = vmatprep.subr.mxu0 0.0
    %95 = vmatpush1.msra.mxu0 0.0
    %96 = vmatprep.subr.mxu0 0.0
    %97 = vmatpush1.msra.mxu0 %v64
    %98 = vmatprep.subr.mxu0 0.0
    %99 = vmatpush1.msra.mxu0 %v63
    %100 = vmatprep.subr.mxu0 0.0
    %101 = vmatpush1.msra.mxu0 %v62
    %102 = vmatprep.subr.mxu0 0.0
    %103 = vmatpush1.msra.mxu0 %v61
    %104 = vmatprep.subr.mxu0 0.0
    %105 = vmatpush2.msra.mxu0 0.0
    %106 = vmatprep.subr.mxu0 0.0
    %107 = vmatpush2.msra.mxu0 0.0
    %108 = vmatprep.subr.mxu0 0.0
    %109 = vmatpush2.msra.mxu0 0.0
    %110 = vmatprep.subr.mxu0 0.0
    %111 = vmatpush2.msra.mxu0 0.0
    %112 = vmatprep.subr.mxu0 0.0
    %113 = vmatpush2.msra.mxu0 0.0
    %114 = vmatprep.subr.mxu0 0.0
    %115 = vmatpush2.msra.mxu0 0.0
    %116 = vmatprep.subr.mxu0 0.0
    %117 = vmatpush2.msra.mxu0 0.0
    %118 = vmatprep.subr.mxu0 0.0
    %119 = vmatpush2.msra.mxu0 0.0
    %120 = vmatprep.subr.mxu0 0.0
    %121 = vmatpush2.msra.mxu0 0.0
    %122 = vmatprep.subr.mxu0 0.0
    %123 = vmatpush2.msra.mxu0 0.0
    %124 = vmatprep.subr.mxu0 0.0
    %125 = vmatpush2.msra.mxu0 0.0
    %126 = vmatprep.subr.mxu0 0.0
    %127 = vmatpush2.msra.mxu0 0.0
    %128 = vmatprep.subr.mxu0 0.0
    %129 = vmatpush2.msra.mxu0 0.0
    %130 = vmatprep.subr.mxu0 0.0
    %131 = vmatpush2.msra.mxu0 0.0
    %132 = vmatprep.subr.mxu0 0.0
    %133 = vmatpush2.msra.mxu0 0.0
    %134 = vmatprep.subr.mxu0 0.0
    %135 = vmatpush2.msra.mxu0 0.0
    %136 = vmatprep.mubr.f32.mxu0 0.0
    %137 = vmatmul.mubr.f32.gmra.mxu0 %v67
    %v138 = vpop.f32.mrf.mxu0
    %v139 = vadd.f32 0.0, %v138
    %v140 = vpop.f32.mrf.mxu0
    %141 = vmatprep.mubr.f32.mxu0 0.0
    %142 = vmatmul.mubr.f32.gmra.mxu0 %v70
    %v143 = vpop.f32.mrf.mxu0
    %v144 = vadd.f32 0.0, %v143
    %v145 = vpop.f32.mrf.mxu0
    %146 = vdwg.mxu0
    %vm147 = vcmask 130048
    %v148 = vsel %vm147, %v139, 0.0
    %v149 = vrot.slane %v148, 4
    %v150 = vadd.f32 %v148, %v149
    %v151 = vrot.slane %v150, 2
    %v152 = vadd.f32 %v150, %v151
    %v153 = vrot.slane %v152, 1
    %v154 = vadd.f32 %v152, %v153
    %v155 = vsel %vm147, %v144, 0.0
    %v156 = vrot.slane %v155, 4
    %v157 = vadd.f32 %v155, %v156
    %v158 = vrot.slane %v157, 2
    %v159 = vadd.f32 %v157, %v158
    %v160 = vrot.slane %v159, 1
    %v161 = vadd.f32 %v159, %v160
    %v162 = vrcp.pop 8.0
    %v163 = vmul.f32 %v154, %v162
    %v164 = vmul.f32 %v161, %v162
    %v165 = vmul.f32 %v163, %v163
    %v166 = vmul.f32 %v164, %v164
    %vm169 = vcmask 1041409
    %v170 = vsel %vm169, %v166, %v165
    %vm172 = vcmask 123904
    %v173 = vsel %vm172, %v170, 0.0
    %174 = vadd.xlane.f32.xlu0 %v173
    %v175 = vpop.xlane.xlu0 %174
    %v176 = vadd.f32 %v175, 1.0
    %v177 = vrcp.pop %v176
    %v178 = vmul.f32 %v175, %v177
    %v181 = vsel %vm169, %v164, %v163
    %v183 = vmul.f32 %v178, %v181
    %v184 = vadd.f32 %v175, 1e-09
    %v185 = vrsqrt.pop %v184
    %v186 = vmul.f32 %v183, %v185
    %v189 = vunpack.c.l.s4 1966171168
    %v190 = vunpack.c.0.s8 %v189
    %v191 = vlaneseq
    %v192 = vshrl.u32 %v191, 7
    %v193 = vsub.s32 %v190, %v192
    %v194 = vrot.slane %v186, %v193
    %v195 = vcombine.high %v194, %v194
    %v197 = vunpack.c.l.s4 1966171168
    %v198 = vunpack.c.0.s8 %v197
    %v199 = vlaneseq
    %v200 = vshrl.u32 %v199, 7
    %v201 = vsub.s32 %v198, %v200
    %v202 = vrot.slane %v194, %v201
    %v204 = vunpack.c.l.s4 1966171168
    %v205 = vunpack.c.0.s8 %v204
    %v206 = vlaneseq
    %v207 = vshrl.u32 %v206, 7
    %v208 = vsub.s32 %v205, %v207
    %v209 = vrot.slane %v195, %v208
    %v210 = vlaneseq
    %v211 = vshrl.u32 %v210, 7
    %v212 = vsub.s32 0, %v211
    %v213 = vrot.slane %v202, %v212
    %v214 = vlaneseq
    %v215 = vshrl.u32 %v214, 7
    %v216 = vsub.s32 0, %v215
    %v217 = vrot.slane %v209, %v216
    %v220 = vmul.f32 %v139, %v213
    %v221 = vmul.f32 %v144, %v217
    %v222 = vsel %vm147, %v220, 0.0
    %223 = vadd.xlane.f32.xlu0 %v222
    %v224 = vpop.xlane.xlu0 %223
    %v225 = vsel %vm147, %v221, 0.0
    %226 = vadd.xlane.f32.xlu0 %v225
    %v227 = vpop.xlane.xlu0 %226
    %v230 = vlaneseq
    %v231 = vand.u32 %v230, 127
    %v232 = vlaneseq
    %v233 = vshrl.u32 %v232, 7
    %v234 = vsub.s32 %v231, %v233
    %v235 = vrot.slane %v224, %v234
    %v236 = vlaneseq
    %v237 = vshrl.u32 %v236, 7
    %v238 = vsub.s32 %v231, %v237
    %v239 = vrot.slane %v227, %v238
    %v240 = vsel %vm169, %v239, %v235
    %vm242 = vcmask 58368
    %v243 = vsel %vm242, %v240, -inf
    %244 = vmax.xlane.f32.xlu0 %v243
    %v245 = vpop.xlane.xlu0 %244
    %v247 = vlaneseq
    %v248 = vshrl.u32 %v247, 7
    %v249 = vsub.s32 0, %v248
    %v250 = vrot.slane %v245, %v249
    %v251 = vlaneseq
    %v252 = vshrl.u32 %v251, 7
    %v253 = vsub.s32 1, %v252
    %v254 = vrot.slane %v245, %v253
    %v257 = vsub.f32 %v224, %v250
    %v258 = vsub.f32 %v227, %v254
    %v259 = vmul.f32 %v257, 1.442695
    %v260 = vpow.pop %v259
    %v261 = vmul.f32 %v258, 1.442695
    %v262 = vpow.pop %v261
    %265 = vset.pattern.permute.xlu0 0
    %266 = vperm.xlu0 %265, %v260
    %v267 = vpop.permute.xlu0 %266
    %268 = vset.pattern.permute.xlu0 0
    %269 = vperm.xlu0 %268, %v262
    %v270 = vpop.permute.xlu0 %269
    %v271 = vlaneseq
    %v272 = vshrl.u32 %v271, 7
    %v273 = vsub.s32 %v231, %v272
    %v274 = vrot.slane %v267, %v273
    %v275 = vlaneseq
    %v276 = vshrl.u32 %v275, 7
    %v277 = vsub.s32 %v231, %v276
    %v278 = vrot.slane %v270, %v277
    %v279 = vsel %vm169, %v278, %v274
    %v281 = vsel %vm242, %v279, 0.0
    %282 = vadd.xlane.f32.xlu0 %v281
    %v283 = vpop.xlane.xlu0 %282
    %v285 = vlaneseq
    %v286 = vshrl.u32 %v285, 7
    %v287 = vsub.s32 0, %v286
    %v288 = vrot.slane %v283, %v287
    %v289 = vlaneseq
    %v290 = vshrl.u32 %v289, 7
    %v291 = vsub.s32 1, %v290
    %v292 = vrot.slane %v283, %v291
    %v295 = vrcp.pop %v288
    %v296 = vmul.f32 %v260, %v295
    %v297 = vrcp.pop %v292
    %v298 = vmul.f32 %v262, %v297
    %300 = vset.pattern.permute.xlu0 0
    %301 = vperm.xlu0 %300, %v296
    %v302 = vpop.permute.xlu0 %301
    %305 = vset.pattern.permute.xlu0 0
    %306 = vperm.xlu0 %305, %v298
    %v307 = vpop.permute.xlu0 %306
    %v309 = vmul.f32 %v139, %v302
    %v310 = vmul.f32 %v144, %v307
    %v311 = vsel %vm147, %v309, 0.0
    %v312 = vrot.slane %v311, 4
    %v313 = vadd.f32 %v311, %v312
    %v314 = vrot.slane %v313, 2
    %v315 = vadd.f32 %v313, %v314
    %v316 = vrot.slane %v315, 1
    %v317 = vadd.f32 %v315, %v316
    %v318 = vsel %vm147, %v310, 0.0
    %v319 = vrot.slane %v318, 4
    %v320 = vadd.f32 %v318, %v319
    %v321 = vrot.slane %v320, 2
    %v322 = vadd.f32 %v320, %v321
    %v323 = vrot.slane %v322, 1
    %v324 = vadd.f32 %v322, %v323
    %v325 = vmul.f32 %v317, %v317
    %v326 = vmul.f32 %v324, %v324
    %v329 = vsel %vm169, %v326, %v325
    %v331 = vsel %vm172, %v329, 0.0
    %332 = vadd.xlane.f32.xlu0 %v331
    %v333 = vpop.xlane.xlu0 %332
    %v334 = vadd.f32 %v333, 1.0
    %v335 = vrcp.pop %v334
    %v336 = vmul.f32 %v333, %v335
    %v339 = vsel %vm169, %v324, %v317
    %v341 = vmul.f32 %v336, %v339
    %v342 = vadd.f32 %v333, 1e-09
    %v343 = vrsqrt.pop %v342
    %v344 = vmul.f32 %v341, %v343
    %v347 = vunpack.c.l.s4 1966171168
    %v348 = vunpack.c.0.s8 %v347
    %v349 = vlaneseq
    %v350 = vshrl.u32 %v349, 7
    %v351 = vsub.s32 %v348, %v350
    %v352 = vrot.slane %v344, %v351
    %v353 = vcombine.high %v352, %v352
    %v355 = vunpack.c.l.s4 1966171168
    %v356 = vunpack.c.0.s8 %v355
    %v357 = vlaneseq
    %v358 = vshrl.u32 %v357, 7
    %v359 = vsub.s32 %v356, %v358
    %v360 = vrot.slane %v352, %v359
    %v362 = vunpack.c.l.s4 1966171168
    %v363 = vunpack.c.0.s8 %v362
    %v364 = vlaneseq
    %v365 = vshrl.u32 %v364, 7
    %v366 = vsub.s32 %v363, %v365
    %v367 = vrot.slane %v353, %v366
    %v368 = vlaneseq
    %v369 = vshrl.u32 %v368, 7
    %v370 = vsub.s32 0, %v369
    %v371 = vrot.slane %v360, %v370
    %v372 = vlaneseq
    %v373 = vshrl.u32 %v372, 7
    %v374 = vsub.s32 0, %v373
    %v375 = vrot.slane %v367, %v374
    %v378 = vmul.f32 %v139, %v371
    %v379 = vmul.f32 %v144, %v375
    %v380 = vsel %vm147, %v378, 0.0
    %381 = vadd.xlane.f32.xlu0 %v380
    %v382 = vpop.xlane.xlu0 %381
    %v383 = vsel %vm147, %v379, 0.0
    %384 = vadd.xlane.f32.xlu0 %v383
    %v385 = vpop.xlane.xlu0 %384
    %v386 = vadd.f32 %v224, %v382
    %v387 = vadd.f32 %v227, %v385
    %v390 = vlaneseq
    %v391 = vshrl.u32 %v390, 7
    %v392 = vsub.s32 %v231, %v391
    %v393 = vrot.slane %v386, %v392
    %v394 = vlaneseq
    %v395 = vshrl.u32 %v394, 7
    %v396 = vsub.s32 %v231, %v395
    %v397 = vrot.slane %v387, %v396
    %v398 = vsel %vm169, %v397, %v393
    %v400 = vsel %vm242, %v398, -inf
    %401 = vmax.xlane.f32.xlu0 %v400
    %v402 = vpop.xlane.xlu0 %401
    %v404 = vlaneseq
    %v405 = vshrl.u32 %v404, 7
    %v406 = vsub.s32 0, %v405
    %v407 = vrot.slane %v402, %v406
    %v408 = vlaneseq
    %v409 = vshrl.u32 %v408, 7
    %v410 = vsub.s32 1, %v409
    %v411 = vrot.slane %v402, %v410
    %v414 = vsub.f32 %v386, %v407
    %v415 = vsub.f32 %v387, %v411
    %v416 = vmul.f32 %v414, 1.442695
    %v417 = vpow.pop %v416
    %v418 = vmul.f32 %v415, 1.442695
    %v419 = vpow.pop %v418
    %422 = vset.pattern.permute.xlu0 0
    %423 = vperm.xlu0 %422, %v417
    %v424 = vpop.permute.xlu0 %423
    %425 = vset.pattern.permute.xlu0 0
    %426 = vperm.xlu0 %425, %v419
    %v427 = vpop.permute.xlu0 %426
    %v428 = vlaneseq
    %v429 = vshrl.u32 %v428, 7
    %v430 = vsub.s32 %v231, %v429
    %v431 = vrot.slane %v424, %v430
    %v432 = vlaneseq
    %v433 = vshrl.u32 %v432, 7
    %v434 = vsub.s32 %v231, %v433
    %v435 = vrot.slane %v427, %v434
    %v436 = vsel %vm169, %v435, %v431
    %v438 = vsel %vm242, %v436, 0.0
    %439 = vadd.xlane.f32.xlu0 %v438
    %v440 = vpop.xlane.xlu0 %439
    %v442 = vlaneseq
    %v443 = vshrl.u32 %v442, 7
    %v444 = vsub.s32 0, %v443
    %v445 = vrot.slane %v440, %v444
    %v446 = vlaneseq
    %v447 = vshrl.u32 %v446, 7
    %v448 = vsub.s32 1, %v447
    %v449 = vrot.slane %v440, %v448
    %v452 = vrcp.pop %v445
    %v453 = vmul.f32 %v417, %v452
    %v454 = vrcp.pop %v449
    %v455 = vmul.f32 %v419, %v454
    %457 = vset.pattern.permute.xlu0 0
    %458 = vperm.xlu0 %457, %v453
    %v459 = vpop.permute.xlu0 %458
    %462 = vset.pattern.permute.xlu0 0
    %463 = vperm.xlu0 %462, %v455
    %v464 = vpop.permute.xlu0 %463
    %v466 = vmul.f32 %v139, %v459
    %v467 = vmul.f32 %v144, %v464
    %v468 = vsel %vm147, %v466, 0.0
    %v469 = vrot.slane %v468, 4
    %v470 = vadd.f32 %v468, %v469
    %v471 = vrot.slane %v470, 2
    %v472 = vadd.f32 %v470, %v471
    %v473 = vrot.slane %v472, 1
    %v474 = vadd.f32 %v472, %v473
    %v475 = vsel %vm147, %v467, 0.0
    %v476 = vrot.slane %v475, 4
    %v477 = vadd.f32 %v475, %v476
    %v478 = vrot.slane %v477, 2
    %v479 = vadd.f32 %v477, %v478
    %v480 = vrot.slane %v479, 1
    %v481 = vadd.f32 %v479, %v480
    %v482 = vmul.f32 %v474, %v474
    %v483 = vmul.f32 %v481, %v481
    %v486 = vsel %vm169, %v483, %v482
    %v488 = vsel %vm172, %v486, 0.0
    %489 = vadd.xlane.f32.xlu0 %v488
    %v490 = vpop.xlane.xlu0 %489
    %v491 = vadd.f32 %v490, 1.0
    %v492 = vrcp.pop %v491
    %v493 = vmul.f32 %v490, %v492
    %v496 = vsel %vm169, %v481, %v474
    %v498 = vmul.f32 %v493, %v496
    %v499 = vadd.f32 %v490, 1e-09
    %v500 = vrsqrt.pop %v499
    %v501 = vmul.f32 %v498, %v500
    %v502 = vadd.f32 %v501, 0.0
    %vm503 = vcmask 261248
    %v504 = vsel %vm503, %v139, 0.0
    %v505 = vrot.slane %v504, 4
    %v506 = vadd.f32 %v504, %v505
    %v507 = vrot.slane %v506, 2
    %v508 = vadd.f32 %v506, %v507
    %v509 = vrot.slane %v508, 1
    %v510 = vadd.f32 %v508, %v509
    %v511 = vsel %vm503, %v144, 0.0
    %v512 = vrot.slane %v511, 4
    %v513 = vadd.f32 %v511, %v512
    %v514 = vrot.slane %v513, 2
    %v515 = vadd.f32 %v513, %v514
    %v516 = vrot.slane %v515, 1
    %v517 = vadd.f32 %v515, %v516
    %v518 = vmul.f32 %v510, %v162
    %v519 = vmul.f32 %v517, %v162
    %v520 = vmul.f32 %v518, %v518
    %v521 = vmul.f32 %v519, %v519
    %v524 = vsel %vm169, %v521, %v520
    %525 = vrot.lane.b32.xlu0 %v524, 112
    %v526 = vpop.permute.xlu0 %525
    %v528 = vsel %vm172, %v526, 0.0
    %529 = vadd.xlane.f32.xlu0 %v528
    %v530 = vpop.xlane.xlu0 %529
    %v531 = vadd.f32 %v530, 1.0
    %v532 = vrcp.pop %v531
    %v533 = vmul.f32 %v530, %v532
    %v536 = vsel %vm169, %v519, %v518
    %537 = vrot.lane.b32.xlu0 %v536, 112
    %v538 = vpop.permute.xlu0 %537
    %v540 = vmul.f32 %v533, %v538
    %v541 = vadd.f32 %v530, 1e-09
    %v542 = vrsqrt.pop %v541
    %v543 = vmul.f32 %v540, %v542
    %v546 = vunpack.c.l.s4 1966171168
    %v547 = vunpack.c.0.s8 %v546
    %v548 = vlaneseq
    %v549 = vshrl.u32 %v548, 7
    %v550 = vsub.s32 %v547, %v549
    %v551 = vrot.slane %v543, %v550
    %v552 = vcombine.high %v551, %v551
    %v554 = vunpack.c.l.s4 1966171168
    %v555 = vunpack.c.0.s8 %v554
    %v556 = vlaneseq
    %v557 = vshrl.u32 %v556, 7
    %v558 = vsub.s32 %v555, %v557
    %v559 = vrot.slane %v551, %v558
    %v561 = vunpack.c.l.s4 1966171168
    %v562 = vunpack.c.0.s8 %v561
    %v563 = vlaneseq
    %v564 = vshrl.u32 %v563, 7
    %v565 = vsub.s32 %v562, %v564
    %v566 = vrot.slane %v552, %v565
    %v567 = vlaneseq
    %v568 = vshrl.u32 %v567, 7
    %v569 = vsub.s32 0, %v568
    %v570 = vrot.slane %v559, %v569
    %v571 = vlaneseq
    %v572 = vshrl.u32 %v571, 7
    %v573 = vsub.s32 0, %v572
    %v574 = vrot.slane %v566, %v573
    %575 = vrot.lane.b32.xlu0 %v570, 16
    %v576 = vpop.permute.xlu0 %575
    %577 = vrot.lane.b32.xlu0 %v574, 16
    %v578 = vpop.permute.xlu0 %577
    %v581 = vmul.f32 %v139, %v576
    %v582 = vmul.f32 %v144, %v578
    %585 = vrot.lane.b32.xlu0 %v581, 112
    %v586 = vpop.permute.xlu0 %585
    %587 = vrot.lane.b32.xlu0 %v582, 112
    %v588 = vpop.permute.xlu0 %587
    %v591 = vsel %vm147, %v586, 0.0
    %592 = vadd.xlane.f32.xlu0 %v591
    %v593 = vpop.xlane.xlu0 %592
    %v594 = vsel %vm147, %v588, 0.0
    %595 = vadd.xlane.f32.xlu0 %v594
    %v596 = vpop.xlane.xlu0 %595
    %v599 = vlaneseq
    %v600 = vshrl.u32 %v599, 7
    %v601 = vsub.s32 %v231, %v600
    %v602 = vrot.slane %v593, %v601
    %v603 = vlaneseq
    %v604 = vshrl.u32 %v603, 7
    %v605 = vsub.s32 %v231, %v604
    %v606 = vrot.slane %v596, %v605
    %v607 = vsel %vm169, %v606, %v602
    %v609 = vsel %vm242, %v607, -inf
    %610 = vmax.xlane.f32.xlu0 %v609
    %v611 = vpop.xlane.xlu0 %610
    %v613 = vlaneseq
    %v614 = vshrl.u32 %v613, 7
    %v615 = vsub.s32 0, %v614
    %v616 = vrot.slane %v611, %v615
    %v617 = vlaneseq
    %v618 = vshrl.u32 %v617, 7
    %v619 = vsub.s32 1, %v618
    %v620 = vrot.slane %v611, %v619
    %v623 = vsub.f32 %v593, %v616
    %v624 = vsub.f32 %v596, %v620
    %v625 = vmul.f32 %v623, 1.442695
    %v626 = vpow.pop %v625
    %v627 = vmul.f32 %v624, 1.442695
    %v628 = vpow.pop %v627
    %631 = vset.pattern.permute.xlu0 0
    %632 = vperm.xlu0 %631, %v626
    %v633 = vpop.permute.xlu0 %632
    %634 = vset.pattern.permute.xlu0 0
    %635 = vperm.xlu0 %634, %v628
    %v636 = vpop.permute.xlu0 %635
    %v637 = vlaneseq
    %v638 = vshrl.u32 %v637, 7
    %v639 = vsub.s32 %v231, %v638
    %v640 = vrot.slane %v633, %v639
    %v641 = vlaneseq
    %v642 = vshrl.u32 %v641, 7
    %v643 = vsub.s32 %v231, %v642
    %v644 = vrot.slane %v636, %v643
    %v645 = vsel %vm169, %v644, %v640
    %v647 = vsel %vm242, %v645, 0.0
    %648 = vadd.xlane.f32.xlu0 %v647
    %v649 = vpop.xlane.xlu0 %648
    %v651 = vlaneseq
    %v652 = vshrl.u32 %v651, 7
    %v653 = vsub.s32 0, %v652
    %v654 = vrot.slane %v649, %v653
    %v655 = vlaneseq
    %v656 = vshrl.u32 %v655, 7
    %v657 = vsub.s32 1, %v656
    %v658 = vrot.slane %v649, %v657
    %v661 = vrcp.pop %v654
    %v662 = vmul.f32 %v626, %v661
    %v663 = vrcp.pop %v658
    %v664 = vmul.f32 %v628, %v663
    %666 = vset.pattern.permute.xlu0 0
    %667 = vperm.xlu0 %666, %v662
    %v668 = vpop.permute.xlu0 %667
    %671 = vset.pattern.permute.xlu0 0
    %672 = vperm.xlu0 %671, %v664
    %v673 = vpop.permute.xlu0 %672
    %v675 = vmul.f32 %v139, %v668
    %v676 = vmul.f32 %v144, %v673
    %v677 = vsel %vm503, %v675, 0.0
    %v678 = vrot.slane %v677, 4
    %v679 = vadd.f32 %v677, %v678
    %v680 = vrot.slane %v679, 2
    %v681 = vadd.f32 %v679, %v680
    %v682 = vrot.slane %v681, 1
    %v683 = vadd.f32 %v681, %v682
    %v684 = vsel %vm503, %v676, 0.0
    %v685 = vrot.slane %v684, 4
    %v686 = vadd.f32 %v684, %v685
    %v687 = vrot.slane %v686, 2
    %v688 = vadd.f32 %v686, %v687
    %v689 = vrot.slane %v688, 1
    %v690 = vadd.f32 %v688, %v689
    %v691 = vmul.f32 %v683, %v683
    %v692 = vmul.f32 %v690, %v690
    %v695 = vsel %vm169, %v692, %v691
    %696 = vrot.lane.b32.xlu0 %v695, 112
    %v697 = vpop.permute.xlu0 %696
    %v699 = vsel %vm172, %v697, 0.0
    %700 = vadd.xlane.f32.xlu0 %v699
    %v701 = vpop.xlane.xlu0 %700
    %v702 = vadd.f32 %v701, 1.0
    %v703 = vrcp.pop %v702
    %v704 = vmul.f32 %v701, %v703
    %v707 = vsel %vm169, %v690, %v683
    %708 = vrot.lane.b32.xlu0 %v707, 112
    %v709 = vpop.permute.xlu0 %708
    %v711 = vmul.f32 %v704, %v709
    %v712 = vadd.f32 %v701, 1e-09
    %v713 = vrsqrt.pop %v712
    %v714 = vmul.f32 %v711, %v713
    %v717 = vunpack.c.l.s4 1966171168
    %v718 = vunpack.c.0.s8 %v717
    %v719 = vlaneseq
    %v720 = vshrl.u32 %v719, 7
    %v721 = vsub.s32 %v718, %v720
    %v722 = vrot.slane %v714, %v721
    %v723 = vcombine.high %v722, %v722
    %v725 = vunpack.c.l.s4 1966171168
    %v726 = vunpack.c.0.s8 %v725
    %v727 = vlaneseq
    %v728 = vshrl.u32 %v727, 7
    %v729 = vsub.s32 %v726, %v728
    %v730 = vrot.slane %v722, %v729
    %v732 = vunpack.c.l.s4 1966171168
    %v733 = vunpack.c.0.s8 %v732
    %v734 = vlaneseq
    %v735 = vshrl.u32 %v734, 7
    %v736 = vsub.s32 %v733, %v735
    %v737 = vrot.slane %v723, %v736
    %v738 = vlaneseq
    %v739 = vshrl.u32 %v738, 7
    %v740 = vsub.s32 0, %v739
    %v741 = vrot.slane %v730, %v740
    %v742 = vlaneseq
    %v743 = vshrl.u32 %v742, 7
    %v744 = vsub.s32 0, %v743
    %v745 = vrot.slane %v737, %v744
    %746 = vrot.lane.b32.xlu0 %v741, 16
    %v747 = vpop.permute.xlu0 %746
    %748 = vrot.lane.b32.xlu0 %v745, 16
    %v749 = vpop.permute.xlu0 %748
    %v752 = vmul.f32 %v139, %v747
    %v753 = vmul.f32 %v144, %v749
    %756 = vrot.lane.b32.xlu0 %v752, 112
    %v757 = vpop.permute.xlu0 %756
    %758 = vrot.lane.b32.xlu0 %v753, 112
    %v759 = vpop.permute.xlu0 %758
    %v762 = vsel %vm147, %v757, 0.0
    %763 = vadd.xlane.f32.xlu0 %v762
    %v764 = vpop.xlane.xlu0 %763
    %v765 = vsel %vm147, %v759, 0.0
    %766 = vadd.xlane.f32.xlu0 %v765
    %v767 = vpop.xlane.xlu0 %766
    %v768 = vadd.f32 %v593, %v764
    %v769 = vadd.f32 %v596, %v767
    %v772 = vlaneseq
    %v773 = vshrl.u32 %v772, 7
    %v774 = vsub.s32 %v231, %v773
    %v775 = vrot.slane %v768, %v774
    %v776 = vlaneseq
    %v777 = vshrl.u32 %v776, 7
    %v778 = vsub.s32 %v231, %v777
    %v779 = vrot.slane %v769, %v778
    %v780 = vsel %vm169, %v779, %v775
    %v782 = vsel %vm242, %v780, -inf
    %783 = vmax.xlane.f32.xlu0 %v782
    %v784 = vpop.xlane.xlu0 %783
    %v786 = vlaneseq
    %v787 = vshrl.u32 %v786, 7
    %v788 = vsub.s32 0, %v787
    %v789 = vrot.slane %v784, %v788
    %v790 = vlaneseq
    %v791 = vshrl.u32 %v790, 7
    %v792 = vsub.s32 1, %v791
    %v793 = vrot.slane %v784, %v792
    %v796 = vsub.f32 %v768, %v789
    %v797 = vsub.f32 %v769, %v793
    %v798 = vmul.f32 %v796, 1.442695
    %v799 = vpow.pop %v798
    %v800 = vmul.f32 %v797, 1.442695
    %v801 = vpow.pop %v800
    %804 = vset.pattern.permute.xlu0 0
    %805 = vperm.xlu0 %804, %v799
    %v806 = vpop.permute.xlu0 %805
    %807 = vset.pattern.permute.xlu0 0
    %808 = vperm.xlu0 %807, %v801
    %v809 = vpop.permute.xlu0 %808
    %v810 = vlaneseq
    %v811 = vshrl.u32 %v810, 7
    %v812 = vsub.s32 %v231, %v811
    %v813 = vrot.slane %v806, %v812
    %v814 = vlaneseq
    %v815 = vshrl.u32 %v814, 7
    %v816 = vsub.s32 %v231, %v815
    %v817 = vrot.slane %v809, %v816
    %v818 = vsel %vm169, %v817, %v813
    %v820 = vsel %vm242, %v818, 0.0
    %821 = vadd.xlane.f32.xlu0 %v820
    %v822 = vpop.xlane.xlu0 %821
    %v824 = vlaneseq
    %v825 = vshrl.u32 %v824, 7
    %v826 = vsub.s32 0, %v825
    %v827 = vrot.slane %v822, %v826
    %v828 = vlaneseq
    %v829 = vshrl.u32 %v828, 7
    %v830 = vsub.s32 1, %v829
    %v831 = vrot.slane %v822, %v830
    %v834 = vrcp.pop %v827
    %v835 = vmul.f32 %v799, %v834
    %v836 = vrcp.pop %v831
    %v837 = vmul.f32 %v801, %v836
    %839 = vset.pattern.permute.xlu0 0
    %840 = vperm.xlu0 %839, %v835
    %v841 = vpop.permute.xlu0 %840
    %844 = vset.pattern.permute.xlu0 0
    %845 = vperm.xlu0 %844, %v837
    %v846 = vpop.permute.xlu0 %845
    %v848 = vmul.f32 %v139, %v841
    %v849 = vmul.f32 %v144, %v846
    %v850 = vsel %vm503, %v848, 0.0
    %v851 = vrot.slane %v850, 4
    %v852 = vadd.f32 %v850, %v851
    %v853 = vrot.slane %v852, 2
    %v854 = vadd.f32 %v852, %v853
    %v855 = vrot.slane %v854, 1
    %v856 = vadd.f32 %v854, %v855
    %v857 = vsel %vm503, %v849, 0.0
    %v858 = vrot.slane %v857, 4
    %v859 = vadd.f32 %v857, %v858
    %v860 = vrot.slane %v859, 2
    %v861 = vadd.f32 %v859, %v860
    %v862 = vrot.slane %v861, 1
    %v863 = vadd.f32 %v861, %v862
    %v864 = vmul.f32 %v856, %v856
    %v865 = vmul.f32 %v863, %v863
    %v868 = vsel %vm169, %v865, %v864
    %869 = vrot.lane.b32.xlu0 %v868, 112
    %v870 = vpop.permute.xlu0 %869
    %v872 = vsel %vm172, %v870, 0.0
    %873 = vadd.xlane.f32.xlu0 %v872
    %v874 = vpop.xlane.xlu0 %873
    %v875 = vadd.f32 %v874, 1.0
    %v876 = vrcp.pop %v875
    %v877 = vmul.f32 %v874, %v876
    %v880 = vsel %vm169, %v863, %v856
    %881 = vrot.lane.b32.xlu0 %v880, 112
    %v882 = vpop.permute.xlu0 %881
    %v884 = vmul.f32 %v877, %v882
    %v885 = vadd.f32 %v874, 1e-09
    %v886 = vrsqrt.pop %v885
    %v887 = vmul.f32 %v884, %v886
    %v888 = vadd.f32 %v502, %v887
    %vm889 = vcmask 392448
    %v890 = vsel %vm889, %v139, 0.0
    %v891 = vrot.slane %v890, 4
    %v892 = vadd.f32 %v890, %v891
    %v893 = vrot.slane %v892, 2
    %v894 = vadd.f32 %v892, %v893
    %v895 = vrot.slane %v894, 1
    %v896 = vadd.f32 %v894, %v895
    %v897 = vsel %vm889, %v144, 0.0
    %v898 = vrot.slane %v897, 4
    %v899 = vadd.f32 %v897, %v898
    %v900 = vrot.slane %v899, 2
    %v901 = vadd.f32 %v899, %v900
    %v902 = vrot.slane %v901, 1
    %v903 = vadd.f32 %v901, %v902
    %v904 = vmul.f32 %v896, %v162
    %v905 = vmul.f32 %v903, %v162
    %v906 = vmul.f32 %v904, %v904
    %v907 = vmul.f32 %v905, %v905
    %v910 = vsel %vm169, %v907, %v906
    %911 = vrot.lane.b32.xlu0 %v910, 96
    %v912 = vpop.permute.xlu0 %911
    %v914 = vsel %vm172, %v912, 0.0
    %915 = vadd.xlane.f32.xlu0 %v914
    %v916 = vpop.xlane.xlu0 %915
    %v917 = vadd.f32 %v916, 1.0
    %v918 = vrcp.pop %v917
    %v919 = vmul.f32 %v916, %v918
    %v922 = vsel %vm169, %v905, %v904
    %923 = vrot.lane.b32.xlu0 %v922, 96
    %v924 = vpop.permute.xlu0 %923
    %v926 = vmul.f32 %v919, %v924
    %v927 = vadd.f32 %v916, 1e-09
    %v928 = vrsqrt.pop %v927
    %v929 = vmul.f32 %v926, %v928
    %v932 = vunpack.c.l.s4 1966171168
    %v933 = vunpack.c.0.s8 %v932
    %v934 = vlaneseq
    %v935 = vshrl.u32 %v934, 7
    %v936 = vsub.s32 %v933, %v935
    %v937 = vrot.slane %v929, %v936
    %v938 = vcombine.high %v937, %v937
    %v940 = vunpack.c.l.s4 1966171168
    %v941 = vunpack.c.0.s8 %v940
    %v942 = vlaneseq
    %v943 = vshrl.u32 %v942, 7
    %v944 = vsub.s32 %v941, %v943
    %v945 = vrot.slane %v937, %v944
    %v947 = vunpack.c.l.s4 1966171168
    %v948 = vunpack.c.0.s8 %v947
    %v949 = vlaneseq
    %v950 = vshrl.u32 %v949, 7
    %v951 = vsub.s32 %v948, %v950
    %v952 = vrot.slane %v938, %v951
    %v953 = vlaneseq
    %v954 = vshrl.u32 %v953, 7
    %v955 = vsub.s32 0, %v954
    %v956 = vrot.slane %v945, %v955
    %v957 = vlaneseq
    %v958 = vshrl.u32 %v957, 7
    %v959 = vsub.s32 0, %v958
    %v960 = vrot.slane %v952, %v959
    %961 = vrot.lane.b32.xlu0 %v956, 32
    %v962 = vpop.permute.xlu0 %961
    %963 = vrot.lane.b32.xlu0 %v960, 32
    %v964 = vpop.permute.xlu0 %963
    %v967 = vmul.f32 %v139, %v962
    %v968 = vmul.f32 %v144, %v964
    %971 = vrot.lane.b32.xlu0 %v967, 96
    %v972 = vpop.permute.xlu0 %971
    %973 = vrot.lane.b32.xlu0 %v968, 96
    %v974 = vpop.permute.xlu0 %973
    %v977 = vsel %vm147, %v972, 0.0
    %978 = vadd.xlane.f32.xlu0 %v977
    %v979 = vpop.xlane.xlu0 %978
    %v980 = vsel %vm147, %v974, 0.0
    %981 = vadd.xlane.f32.xlu0 %v980
    %v982 = vpop.xlane.xlu0 %981
    %v985 = vlaneseq
    %v986 = vshrl.u32 %v985, 7
    %v987 = vsub.s32 %v231, %v986
    %v988 = vrot.slane %v979, %v987
    %v989 = vlaneseq
    %v990 = vshrl.u32 %v989, 7
    %v991 = vsub.s32 %v231, %v990
    %v992 = vrot.slane %v982, %v991
    %v993 = vsel %vm169, %v992, %v988
    %v995 = vsel %vm242, %v993, -inf
    %996 = vmax.xlane.f32.xlu0 %v995
    %v997 = vpop.xlane.xlu0 %996
    %v999 = vlaneseq
    %v1000 = vshrl.u32 %v999, 7
    %v1001 = vsub.s32 0, %v1000
    %v1002 = vrot.slane %v997, %v1001
    %v1003 = vlaneseq
    %v1004 = vshrl.u32 %v1003, 7
    %v1005 = vsub.s32 1, %v1004
    %v1006 = vrot.slane %v997, %v1005
    %v1009 = vsub.f32 %v979, %v1002
    %v1010 = vsub.f32 %v982, %v1006
    %v1011 = vmul.f32 %v1009, 1.442695
    %v1012 = vpow.pop %v1011
    %v1013 = vmul.f32 %v1010, 1.442695
    %v1014 = vpow.pop %v1013
    %1017 = vset.pattern.permute.xlu0 0
    %1018 = vperm.xlu0 %1017, %v1012
    %v1019 = vpop.permute.xlu0 %1018
    %1020 = vset.pattern.permute.xlu0 0
    %1021 = vperm.xlu0 %1020, %v1014
    %v1022 = vpop.permute.xlu0 %1021
    %v1023 = vlaneseq
    %v1024 = vshrl.u32 %v1023, 7
    %v1025 = vsub.s32 %v231, %v1024
    %v1026 = vrot.slane %v1019, %v1025
    %v1027 = vlaneseq
    %v1028 = vshrl.u32 %v1027, 7
    %v1029 = vsub.s32 %v231, %v1028
    %v1030 = vrot.slane %v1022, %v1029
    %v1031 = vsel %vm169, %v1030, %v1026
    %v1033 = vsel %vm242, %v1031, 0.0
    %1034 = vadd.xlane.f32.xlu0 %v1033
    %v1035 = vpop.xlane.xlu0 %1034
    %v1037 = vlaneseq
    %v1038 = vshrl.u32 %v1037, 7
    %v1039 = vsub.s32 0, %v1038
    %v1040 = vrot.slane %v1035, %v1039
    %v1041 = vlaneseq
    %v1042 = vshrl.u32 %v1041, 7
    %v1043 = vsub.s32 1, %v1042
    %v1044 = vrot.slane %v1035, %v1043
    %v1047 = vrcp.pop %v1040
    %v1048 = vmul.f32 %v1012, %v1047
    %v1049 = vrcp.pop %v1044
    %v1050 = vmul.f32 %v1014, %v1049
    %1052 = vset.pattern.permute.xlu0 0
    %1053 = vperm.xlu0 %1052, %v1048
    %v1054 = vpop.permute.xlu0 %1053
    %1057 = vset.pattern.permute.xlu0 0
    %1058 = vperm.xlu0 %1057, %v1050
    %v1059 = vpop.permute.xlu0 %1058
    %v1061 = vmul.f32 %v139, %v1054
    %v1062 = vmul.f32 %v144, %v1059
    %v1063 = vsel %vm889, %v1061, 0.0
    %v1064 = vrot.slane %v1063, 4
    %v1065 = vadd.f32 %v1063, %v1064
    %v1066 = vrot.slane %v1065, 2
    %v1067 = vadd.f32 %v1065, %v1066
    %v1068 = vrot.slane %v1067, 1
    %v1069 = vadd.f32 %v1067, %v1068
    %v1070 = vsel %vm889, %v1062, 0.0
    %v1071 = vrot.slane %v1070, 4
    %v1072 = vadd.f32 %v1070, %v1071
    %v1073 = vrot.slane %v1072, 2
    %v1074 = vadd.f32 %v1072, %v1073
    %v1075 = vrot.slane %v1074, 1
    %v1076 = vadd.f32 %v1074, %v1075
    %v1077 = vmul.f32 %v1069, %v1069
    %v1078 = vmul.f32 %v1076, %v1076
    %v1081 = vsel %vm169, %v1078, %v1077
    %1082 = vrot.lane.b32.xlu0 %v1081, 96
    %v1083 = vpop.permute.xlu0 %1082
    %v1085 = vsel %vm172, %v1083, 0.0
    %1086 = vadd.xlane.f32.xlu0 %v1085
    %v1087 = vpop.xlane.xlu0 %1086
    %v1088 = vadd.f32 %v1087, 1.0
    %v1089 = vrcp.pop %v1088
    %v1090 = vmul.f32 %v1087, %v1089
    %v1093 = vsel %vm169, %v1076, %v1069
    %1094 = vrot.lane.b32.xlu0 %v1093, 96
    %v1095 = vpop.permute.xlu0 %1094
    %v1097 = vmul.f32 %v1090, %v1095
    %v1098 = vadd.f32 %v1087, 1e-09
    %v1099 = vrsqrt.pop %v1098
    %v1100 = vmul.f32 %v1097, %v1099
    %v1103 = vunpack.c.l.s4 1966171168
    %v1104 = vunpack.c.0.s8 %v1103
    %v1105 = vlaneseq
    %v1106 = vshrl.u32 %v1105, 7
    %v1107 = vsub.s32 %v1104, %v1106
    %v1108 = vrot.slane %v1100, %v1107
    %v1109 = vcombine.high %v1108, %v1108
    %v1111 = vunpack.c.l.s4 1966171168
    %v1112 = vunpack.c.0.s8 %v1111
    %v1113 = vlaneseq
    %v1114 = vshrl.u32 %v1113, 7
    %v1115 = vsub.s32 %v1112, %v1114
    %v1116 = vrot.slane %v1108, %v1115
    %v1118 = vunpack.c.l.s4 1966171168
    %v1119 = vunpack.c.0.s8 %v1118
    %v1120 = vlaneseq
    %v1121 = vshrl.u32 %v1120, 7
    %v1122 = vsub.s32 %v1119, %v1121
    %v1123 = vrot.slane %v1109, %v1122
    %v1124 = vlaneseq
    %v1125 = vshrl.u32 %v1124, 7
    %v1126 = vsub.s32 0, %v1125
    %v1127 = vrot.slane %v1116, %v1126
    %v1128 = vlaneseq
    %v1129 = vshrl.u32 %v1128, 7
    %v1130 = vsub.s32 0, %v1129
    %v1131 = vrot.slane %v1123, %v1130
    %1132 = vrot.lane.b32.xlu0 %v1127, 32
    %v1133 = vpop.permute.xlu0 %1132
    %1134 = vrot.lane.b32.xlu0 %v1131, 32
    %v1135 = vpop.permute.xlu0 %1134
    %v1138 = vmul.f32 %v139, %v1133
    %v1139 = vmul.f32 %v144, %v1135
    %1142 = vrot.lane.b32.xlu0 %v1138, 96
    %v1143 = vpop.permute.xlu0 %1142
    %1144 = vrot.lane.b32.xlu0 %v1139, 96
    %v1145 = vpop.permute.xlu0 %1144
    %v1148 = vsel %vm147, %v1143, 0.0
    %1149 = vadd.xlane.f32.xlu0 %v1148
    %v1150 = vpop.xlane.xlu0 %1149
    %v1151 = vsel %vm147, %v1145, 0.0
    %1152 = vadd.xlane.f32.xlu0 %v1151
    %v1153 = vpop.xlane.xlu0 %1152
    %v1154 = vadd.f32 %v979, %v1150
    %v1155 = vadd.f32 %v982, %v1153
    %v1158 = vlaneseq
    %v1159 = vshrl.u32 %v1158, 7
    %v1160 = vsub.s32 %v231, %v1159
    %v1161 = vrot.slane %v1154, %v1160
    %v1162 = vlaneseq
    %v1163 = vshrl.u32 %v1162, 7
    %v1164 = vsub.s32 %v231, %v1163
    %v1165 = vrot.slane %v1155, %v1164
    %v1166 = vsel %vm169, %v1165, %v1161
    %v1168 = vsel %vm242, %v1166, -inf
    %1169 = vmax.xlane.f32.xlu0 %v1168
    %v1170 = vpop.xlane.xlu0 %1169
    %v1172 = vlaneseq
    %v1173 = vshrl.u32 %v1172, 7
    %v1174 = vsub.s32 0, %v1173
    %v1175 = vrot.slane %v1170, %v1174
    %v1176 = vlaneseq
    %v1177 = vshrl.u32 %v1176, 7
    %v1178 = vsub.s32 1, %v1177
    %v1179 = vrot.slane %v1170, %v1178
    %v1182 = vsub.f32 %v1154, %v1175
    %v1183 = vsub.f32 %v1155, %v1179
    %v1184 = vmul.f32 %v1182, 1.442695
    %v1185 = vpow.pop %v1184
    %v1186 = vmul.f32 %v1183, 1.442695
    %v1187 = vpow.pop %v1186
    %1190 = vset.pattern.permute.xlu0 0
    %1191 = vperm.xlu0 %1190, %v1185
    %v1192 = vpop.permute.xlu0 %1191
    %1193 = vset.pattern.permute.xlu0 0
    %1194 = vperm.xlu0 %1193, %v1187
    %v1195 = vpop.permute.xlu0 %1194
    %v1196 = vlaneseq
    %v1197 = vshrl.u32 %v1196, 7
    %v1198 = vsub.s32 %v231, %v1197
    %v1199 = vrot.slane %v1192, %v1198
    %v1200 = vlaneseq
    %v1201 = vshrl.u32 %v1200, 7
    %v1202 = vsub.s32 %v231, %v1201
    %v1203 = vrot.slane %v1195, %v1202
    %v1204 = vsel %vm169, %v1203, %v1199
    %v1206 = vsel %vm242, %v1204, 0.0
    %1207 = vadd.xlane.f32.xlu0 %v1206
    %v1208 = vpop.xlane.xlu0 %1207
    %v1210 = vlaneseq
    %v1211 = vshrl.u32 %v1210, 7
    %v1212 = vsub.s32 0, %v1211
    %v1213 = vrot.slane %v1208, %v1212
    %v1214 = vlaneseq
    %v1215 = vshrl.u32 %v1214, 7
    %v1216 = vsub.s32 1, %v1215
    %v1217 = vrot.slane %v1208, %v1216
    %v1220 = vrcp.pop %v1213
    %v1221 = vmul.f32 %v1185, %v1220
    %v1222 = vrcp.pop %v1217
    %v1223 = vmul.f32 %v1187, %v1222
    %1225 = vset.pattern.permute.xlu0 0
    %1226 = vperm.xlu0 %1225, %v1221
    %v1227 = vpop.permute.xlu0 %1226
    %1230 = vset.pattern.permute.xlu0 0
    %1231 = vperm.xlu0 %1230, %v1223
    %v1232 = vpop.permute.xlu0 %1231
    %v1234 = vmul.f32 %v139, %v1227
    %v1235 = vmul.f32 %v144, %v1232
    %v1236 = vsel %vm889, %v1234, 0.0
    %v1237 = vrot.slane %v1236, 4
    %v1238 = vadd.f32 %v1236, %v1237
    %v1239 = vrot.slane %v1238, 2
    %v1240 = vadd.f32 %v1238, %v1239
    %v1241 = vrot.slane %v1240, 1
    %v1242 = vadd.f32 %v1240, %v1241
    %v1243 = vsel %vm889, %v1235, 0.0
    %v1244 = vrot.slane %v1243, 4
    %v1245 = vadd.f32 %v1243, %v1244
    %v1246 = vrot.slane %v1245, 2
    %v1247 = vadd.f32 %v1245, %v1246
    %v1248 = vrot.slane %v1247, 1
    %v1249 = vadd.f32 %v1247, %v1248
    %v1250 = vmul.f32 %v1242, %v1242
    %v1251 = vmul.f32 %v1249, %v1249
    %v1254 = vsel %vm169, %v1251, %v1250
    %1255 = vrot.lane.b32.xlu0 %v1254, 96
    %v1256 = vpop.permute.xlu0 %1255
    %v1258 = vsel %vm172, %v1256, 0.0
    %1259 = vadd.xlane.f32.xlu0 %v1258
    %v1260 = vpop.xlane.xlu0 %1259
    %v1261 = vadd.f32 %v1260, 1.0
    %v1262 = vrcp.pop %v1261
    %v1263 = vmul.f32 %v1260, %v1262
    %v1266 = vsel %vm169, %v1249, %v1242
    %1267 = vrot.lane.b32.xlu0 %v1266, 96
    %v1268 = vpop.permute.xlu0 %1267
    %v1270 = vmul.f32 %v1263, %v1268
    %v1271 = vadd.f32 %v1260, 1e-09
    %v1272 = vrsqrt.pop %v1271
    %v1273 = vmul.f32 %v1270, %v1272
    %v1274 = vadd.f32 %v888, %v1273
    %vm1275 = vcmask 523648
    %v1276 = vsel %vm1275, %v139, 0.0
    %v1277 = vrot.slane %v1276, 4
    %v1278 = vadd.f32 %v1276, %v1277
    %v1279 = vrot.slane %v1278, 2
    %v1280 = vadd.f32 %v1278, %v1279
    %v1281 = vrot.slane %v1280, 1
    %v1282 = vadd.f32 %v1280, %v1281
    %v1283 = vsel %vm1275, %v144, 0.0
    %v1284 = vrot.slane %v1283, 4
    %v1285 = vadd.f32 %v1283, %v1284
    %v1286 = vrot.slane %v1285, 2
    %v1287 = vadd.f32 %v1285, %v1286
    %v1288 = vrot.slane %v1287, 1
    %v1289 = vadd.f32 %v1287, %v1288
    %v1290 = vmul.f32 %v1282, %v162
    %v1291 = vmul.f32 %v1289, %v162
    %v1292 = vmul.f32 %v1290, %v1290
    %v1293 = vmul.f32 %v1291, %v1291
    %v1296 = vsel %vm169, %v1293, %v1292
    %1297 = vrot.lane.b32.xlu0 %v1296, 80
    %v1298 = vpop.permute.xlu0 %1297
    %v1300 = vsel %vm172, %v1298, 0.0
    %1301 = vadd.xlane.f32.xlu0 %v1300
    %v1302 = vpop.xlane.xlu0 %1301
    %v1303 = vadd.f32 %v1302, 1.0
    %v1304 = vrcp.pop %v1303
    %v1305 = vmul.f32 %v1302, %v1304
    %v1308 = vsel %vm169, %v1291, %v1290
    %1309 = vrot.lane.b32.xlu0 %v1308, 80
    %v1310 = vpop.permute.xlu0 %1309
    %v1312 = vmul.f32 %v1305, %v1310
    %v1313 = vadd.f32 %v1302, 1e-09
    %v1314 = vrsqrt.pop %v1313
    %v1315 = vmul.f32 %v1312, %v1314
    %v1318 = vunpack.c.l.s4 1966171168
    %v1319 = vunpack.c.0.s8 %v1318
    %v1320 = vlaneseq
    %v1321 = vshrl.u32 %v1320, 7
    %v1322 = vsub.s32 %v1319, %v1321
    %v1323 = vrot.slane %v1315, %v1322
    %v1324 = vcombine.high %v1323, %v1323
    %v1326 = vunpack.c.l.s4 1966171168
    %v1327 = vunpack.c.0.s8 %v1326
    %v1328 = vlaneseq
    %v1329 = vshrl.u32 %v1328, 7
    %v1330 = vsub.s32 %v1327, %v1329
    %v1331 = vrot.slane %v1323, %v1330
    %v1333 = vunpack.c.l.s4 1966171168
    %v1334 = vunpack.c.0.s8 %v1333
    %v1335 = vlaneseq
    %v1336 = vshrl.u32 %v1335, 7
    %v1337 = vsub.s32 %v1334, %v1336
    %v1338 = vrot.slane %v1324, %v1337
    %v1339 = vlaneseq
    %v1340 = vshrl.u32 %v1339, 7
    %v1341 = vsub.s32 0, %v1340
    %v1342 = vrot.slane %v1331, %v1341
    %v1343 = vlaneseq
    %v1344 = vshrl.u32 %v1343, 7
    %v1345 = vsub.s32 0, %v1344
    %v1346 = vrot.slane %v1338, %v1345
    %1347 = vrot.lane.b32.xlu0 %v1342, 48
    %v1348 = vpop.permute.xlu0 %1347
    %1349 = vrot.lane.b32.xlu0 %v1346, 48
    %v1350 = vpop.permute.xlu0 %1349
    %v1353 = vmul.f32 %v139, %v1348
    %v1354 = vmul.f32 %v144, %v1350
    %1357 = vrot.lane.b32.xlu0 %v1353, 80
    %v1358 = vpop.permute.xlu0 %1357
    %1359 = vrot.lane.b32.xlu0 %v1354, 80
    %v1360 = vpop.permute.xlu0 %1359
    %v1363 = vsel %vm147, %v1358, 0.0
    %1364 = vadd.xlane.f32.xlu0 %v1363
    %v1365 = vpop.xlane.xlu0 %1364
    %v1366 = vsel %vm147, %v1360, 0.0
    %1367 = vadd.xlane.f32.xlu0 %v1366
    %v1368 = vpop.xlane.xlu0 %1367
    %v1371 = vlaneseq
    %v1372 = vshrl.u32 %v1371, 7
    %v1373 = vsub.s32 %v231, %v1372
    %v1374 = vrot.slane %v1365, %v1373
    %v1375 = vlaneseq
    %v1376 = vshrl.u32 %v1375, 7
    %v1377 = vsub.s32 %v231, %v1376
    %v1378 = vrot.slane %v1368, %v1377
    %v1379 = vsel %vm169, %v1378, %v1374
    %v1381 = vsel %vm242, %v1379, -inf
    %1382 = vmax.xlane.f32.xlu0 %v1381
    %v1383 = vpop.xlane.xlu0 %1382
    %v1385 = vlaneseq
    %v1386 = vshrl.u32 %v1385, 7
    %v1387 = vsub.s32 0, %v1386
    %v1388 = vrot.slane %v1383, %v1387
    %v1389 = vlaneseq
    %v1390 = vshrl.u32 %v1389, 7
    %v1391 = vsub.s32 1, %v1390
    %v1392 = vrot.slane %v1383, %v1391
    %v1395 = vsub.f32 %v1365, %v1388
    %v1396 = vsub.f32 %v1368, %v1392
    %v1397 = vmul.f32 %v1395, 1.442695
    %v1398 = vpow.pop %v1397
    %v1399 = vmul.f32 %v1396, 1.442695
    %v1400 = vpow.pop %v1399
    %1403 = vset.pattern.permute.xlu0 0
    %1404 = vperm.xlu0 %1403, %v1398
    %v1405 = vpop.permute.xlu0 %1404
    %1406 = vset.pattern.permute.xlu0 0
    %1407 = vperm.xlu0 %1406, %v1400
    %v1408 = vpop.permute.xlu0 %1407
    %v1409 = vlaneseq
    %v1410 = vshrl.u32 %v1409, 7
    %v1411 = vsub.s32 %v231, %v1410
    %v1412 = vrot.slane %v1405, %v1411
    %v1413 = vlaneseq
    %v1414 = vshrl.u32 %v1413, 7
    %v1415 = vsub.s32 %v231, %v1414
    %v1416 = vrot.slane %v1408, %v1415
    %v1417 = vsel %vm169, %v1416, %v1412
    %v1419 = vsel %vm242, %v1417, 0.0
    %1420 = vadd.xlane.f32.xlu0 %v1419
    %v1421 = vpop.xlane.xlu0 %1420
    %v1423 = vlaneseq
    %v1424 = vshrl.u32 %v1423, 7
    %v1425 = vsub.s32 0, %v1424
    %v1426 = vrot.slane %v1421, %v1425
    %v1427 = vlaneseq
    %v1428 = vshrl.u32 %v1427, 7
    %v1429 = vsub.s32 1, %v1428
    %v1430 = vrot.slane %v1421, %v1429
    %v1433 = vrcp.pop %v1426
    %v1434 = vmul.f32 %v1398, %v1433
    %v1435 = vrcp.pop %v1430
    %v1436 = vmul.f32 %v1400, %v1435
    %1438 = vset.pattern.permute.xlu0 0
    %1439 = vperm.xlu0 %1438, %v1434
    %v1440 = vpop.permute.xlu0 %1439
    %1443 = vset.pattern.permute.xlu0 0
    %1444 = vperm.xlu0 %1443, %v1436
    %v1445 = vpop.permute.xlu0 %1444
    %v1447 = vmul.f32 %v139, %v1440
    %v1448 = vmul.f32 %v144, %v1445
    %v1449 = vsel %vm1275, %v1447, 0.0
    %v1450 = vrot.slane %v1449, 4
    %v1451 = vadd.f32 %v1449, %v1450
    %v1452 = vrot.slane %v1451, 2
    %v1453 = vadd.f32 %v1451, %v1452
    %v1454 = vrot.slane %v1453, 1
    %v1455 = vadd.f32 %v1453, %v1454
    %v1456 = vsel %vm1275, %v1448, 0.0
    %v1457 = vrot.slane %v1456, 4
    %v1458 = vadd.f32 %v1456, %v1457
    %v1459 = vrot.slane %v1458, 2
    %v1460 = vadd.f32 %v1458, %v1459
    %v1461 = vrot.slane %v1460, 1
    %v1462 = vadd.f32 %v1460, %v1461
    %v1463 = vmul.f32 %v1455, %v1455
    %v1464 = vmul.f32 %v1462, %v1462
    %v1467 = vsel %vm169, %v1464, %v1463
    %1468 = vrot.lane.b32.xlu0 %v1467, 80
    %v1469 = vpop.permute.xlu0 %1468
    %v1471 = vsel %vm172, %v1469, 0.0
    %1472 = vadd.xlane.f32.xlu0 %v1471
    %v1473 = vpop.xlane.xlu0 %1472
    %v1474 = vadd.f32 %v1473, 1.0
    %v1475 = vrcp.pop %v1474
    %v1476 = vmul.f32 %v1473, %v1475
    %v1479 = vsel %vm169, %v1462, %v1455
    %1480 = vrot.lane.b32.xlu0 %v1479, 80
    %v1481 = vpop.permute.xlu0 %1480
    %v1483 = vmul.f32 %v1476, %v1481
    %v1484 = vadd.f32 %v1473, 1e-09
    %v1485 = vrsqrt.pop %v1484
    %v1486 = vmul.f32 %v1483, %v1485
    %v1489 = vunpack.c.l.s4 1966171168
    %v1490 = vunpack.c.0.s8 %v1489
    %v1491 = vlaneseq
    %v1492 = vshrl.u32 %v1491, 7
    %v1493 = vsub.s32 %v1490, %v1492
    %v1494 = vrot.slane %v1486, %v1493
    %v1495 = vcombine.high %v1494, %v1494
    %v1497 = vunpack.c.l.s4 1966171168
    %v1498 = vunpack.c.0.s8 %v1497
    %v1499 = vlaneseq
    %v1500 = vshrl.u32 %v1499, 7
    %v1501 = vsub.s32 %v1498, %v1500
    %v1502 = vrot.slane %v1494, %v1501
    %v1504 = vunpack.c.l.s4 1966171168
    %v1505 = vunpack.c.0.s8 %v1504
    %v1506 = vlaneseq
    %v1507 = vshrl.u32 %v1506, 7
    %v1508 = vsub.s32 %v1505, %v1507
    %v1509 = vrot.slane %v1495, %v1508
    %v1510 = vlaneseq
    %v1511 = vshrl.u32 %v1510, 7
    %v1512 = vsub.s32 0, %v1511
    %v1513 = vrot.slane %v1502, %v1512
    %v1514 = vlaneseq
    %v1515 = vshrl.u32 %v1514, 7
    %v1516 = vsub.s32 0, %v1515
    %v1517 = vrot.slane %v1509, %v1516
    %1518 = vrot.lane.b32.xlu0 %v1513, 48
    %v1519 = vpop.permute.xlu0 %1518
    %1520 = vrot.lane.b32.xlu0 %v1517, 48
    %v1521 = vpop.permute.xlu0 %1520
    %v1524 = vmul.f32 %v139, %v1519
    %v1525 = vmul.f32 %v144, %v1521
    %1528 = vrot.lane.b32.xlu0 %v1524, 80
    %v1529 = vpop.permute.xlu0 %1528
    %1530 = vrot.lane.b32.xlu0 %v1525, 80
    %v1531 = vpop.permute.xlu0 %1530
    %v1534 = vsel %vm147, %v1529, 0.0
    %1535 = vadd.xlane.f32.xlu0 %v1534
    %v1536 = vpop.xlane.xlu0 %1535
    %v1537 = vsel %vm147, %v1531, 0.0
    %1538 = vadd.xlane.f32.xlu0 %v1537
    %v1539 = vpop.xlane.xlu0 %1538
    %v1540 = vadd.f32 %v1365, %v1536
    %v1541 = vadd.f32 %v1368, %v1539
    %v1544 = vlaneseq
    %v1545 = vshrl.u32 %v1544, 7
    %v1546 = vsub.s32 %v231, %v1545
    %v1547 = vrot.slane %v1540, %v1546
    %v1548 = vlaneseq
    %v1549 = vshrl.u32 %v1548, 7
    %v1550 = vsub.s32 %v231, %v1549
    %v1551 = vrot.slane %v1541, %v1550
    %v1552 = vsel %vm169, %v1551, %v1547
    %v1554 = vsel %vm242, %v1552, -inf
    %1555 = vmax.xlane.f32.xlu0 %v1554
    %v1556 = vpop.xlane.xlu0 %1555
    %v1558 = vlaneseq
    %v1559 = vshrl.u32 %v1558, 7
    %v1560 = vsub.s32 0, %v1559
    %v1561 = vrot.slane %v1556, %v1560
    %v1562 = vlaneseq
    %v1563 = vshrl.u32 %v1562, 7
    %v1564 = vsub.s32 1, %v1563
    %v1565 = vrot.slane %v1556, %v1564
    %v1568 = vsub.f32 %v1540, %v1561
    %v1569 = vsub.f32 %v1541, %v1565
    %v1570 = vmul.f32 %v1568, 1.442695
    %v1571 = vpow.pop %v1570
    %v1572 = vmul.f32 %v1569, 1.442695
    %v1573 = vpow.pop %v1572
    %1576 = vset.pattern.permute.xlu0 0
    %1577 = vperm.xlu0 %1576, %v1571
    %v1578 = vpop.permute.xlu0 %1577
    %1579 = vset.pattern.permute.xlu0 0
    %1580 = vperm.xlu0 %1579, %v1573
    %v1581 = vpop.permute.xlu0 %1580
    %v1582 = vlaneseq
    %v1583 = vshrl.u32 %v1582, 7
    %v1584 = vsub.s32 %v231, %v1583
    %v1585 = vrot.slane %v1578, %v1584
    %v1586 = vlaneseq
    %v1587 = vshrl.u32 %v1586, 7
    %v1588 = vsub.s32 %v231, %v1587
    %v1589 = vrot.slane %v1581, %v1588
    %v1590 = vsel %vm169, %v1589, %v1585
    %v1592 = vsel %vm242, %v1590, 0.0
    %1593 = vadd.xlane.f32.xlu0 %v1592
    %v1594 = vpop.xlane.xlu0 %1593
    %v1596 = vlaneseq
    %v1597 = vshrl.u32 %v1596, 7
    %v1598 = vsub.s32 0, %v1597
    %v1599 = vrot.slane %v1594, %v1598
    %v1600 = vlaneseq
    %v1601 = vshrl.u32 %v1600, 7
    %v1602 = vsub.s32 1, %v1601
    %v1603 = vrot.slane %v1594, %v1602
    %v1606 = vrcp.pop %v1599
    %v1607 = vmul.f32 %v1571, %v1606
    %v1608 = vrcp.pop %v1603
    %v1609 = vmul.f32 %v1573, %v1608
    %1611 = vset.pattern.permute.xlu0 0
    %1612 = vperm.xlu0 %1611, %v1607
    %v1613 = vpop.permute.xlu0 %1612
    %1616 = vset.pattern.permute.xlu0 0
    %1617 = vperm.xlu0 %1616, %v1609
    %v1618 = vpop.permute.xlu0 %1617
    %v1620 = vmul.f32 %v139, %v1613
    %v1621 = vmul.f32 %v144, %v1618
    %v1622 = vsel %vm1275, %v1620, 0.0
    %v1623 = vrot.slane %v1622, 4
    %v1624 = vadd.f32 %v1622, %v1623
    %v1625 = vrot.slane %v1624, 2
    %v1626 = vadd.f32 %v1624, %v1625
    %v1627 = vrot.slane %v1626, 1
    %v1628 = vadd.f32 %v1626, %v1627
    %v1629 = vsel %vm1275, %v1621, 0.0
    %v1630 = vrot.slane %v1629, 4
    %v1631 = vadd.f32 %v1629, %v1630
    %v1632 = vrot.slane %v1631, 2
    %v1633 = vadd.f32 %v1631, %v1632
    %v1634 = vrot.slane %v1633, 1
    %v1635 = vadd.f32 %v1633, %v1634
    %v1636 = vmul.f32 %v1628, %v1628
    %v1637 = vmul.f32 %v1635, %v1635
    %v1640 = vsel %vm169, %v1637, %v1636
    %1641 = vrot.lane.b32.xlu0 %v1640, 80
    %v1642 = vpop.permute.xlu0 %1641
    %v1644 = vsel %vm172, %v1642, 0.0
    %1645 = vadd.xlane.f32.xlu0 %v1644
    %v1646 = vpop.xlane.xlu0 %1645
    %v1647 = vadd.f32 %v1646, 1.0
    %v1648 = vrcp.pop %v1647
    %v1649 = vmul.f32 %v1646, %v1648
    %v1652 = vsel %vm169, %v1635, %v1628
    %1653 = vrot.lane.b32.xlu0 %v1652, 80
    %v1654 = vpop.permute.xlu0 %1653
    %v1656 = vmul.f32 %v1649, %v1654
    %v1657 = vadd.f32 %v1646, 1e-09
    %v1658 = vrsqrt.pop %v1657
    %v1659 = vmul.f32 %v1656, %v1658
    %v1660 = vadd.f32 %v1274, %v1659
    %v1661 = vld [vmem:[#allocation7] sm:$0xff]
    %v1662 = vld [vmem:[#allocation7 + $0x8] sm:$0xff]
    %v1663 = vld [vmem:[%s3] sm:$0x1]
    %v1665 = vlaneseq
    %v1666 = vshrl.u32 %v1665, 7
    %v1667 = vsub.s32 0, %v1666
    %v1668 = vrot.slane %v1663, %v1667
    %v1671 = vsel %vm147, %v1660, 0
    %1673 = vmatprep.subr.mxu0 0.0
    %1674 = vmatpush1.msra.mxu0 0.0
    %1675 = vmatprep.subr.mxu0 0.0
    %1676 = vmatpush1.msra.mxu0 0.0
    %1677 = vmatprep.subr.mxu0 0.0
    %1678 = vmatpush1.msra.mxu0 0.0
    %1679 = vmatprep.subr.mxu0 0.0
    %1680 = vmatpush1.msra.mxu0 0.0
    %1681 = vmatprep.subr.mxu0 0.0
    %1682 = vmatpush1.msra.mxu0 0.0
    %1683 = vmatprep.subr.mxu0 0.0
    %1684 = vmatpush1.msra.mxu0 0.0
    %1685 = vmatprep.subr.mxu0 0.0
    %1686 = vmatpush1.msra.mxu0 0.0
    %1687 = vmatprep.subr.mxu0 0.0
    %1688 = vmatpush1.msra.mxu0 0.0
    %1689 = vmatprep.subr.mxu0 0.0
    %1690 = vmatpush1.msra.mxu0 0.0
    %1691 = vmatprep.subr.mxu0 0.0
    %1692 = vmatpush1.msra.mxu0 0.0
    %1693 = vmatprep.subr.mxu0 0.0
    %1694 = vmatpush1.msra.mxu0 0.0
    %1695 = vmatprep.subr.mxu0 0.0
    %1696 = vmatpush1.msra.mxu0 0.0
    %1697 = vmatprep.subr.mxu0 0.0
    %1698 = vmatpush1.msra.mxu0 0.0
    %1699 = vmatprep.subr.mxu0 0.0
    %1700 = vmatpush1.msra.mxu0 0.0
    %1701 = vmatprep.subr.mxu0 0.0
    %1702 = vmatpush1.msra.mxu0 %v1662
    %1703 = vmatprep.subr.mxu0 0.0
    %1704 = vmatpush1.msra.mxu0 %v1661
    %1705 = vmatprep.subr.mxu0 0.0
    %1706 = vmatpush2.msra.mxu0 0.0
    %1707 = vmatprep.subr.mxu0 0.0
    %1708 = vmatpush2.msra.mxu0 0.0
    %1709 = vmatprep.subr.mxu0 0.0
    %1710 = vmatpush2.msra.mxu0 0.0
    %1711 = vmatprep.subr.mxu0 0.0
    %1712 = vmatpush2.msra.mxu0 0.0
    %1713 = vmatprep.subr.mxu0 0.0
    %1714 = vmatpush2.msra.mxu0 0.0
    %1715 = vmatprep.subr.mxu0 0.0
    %1716 = vmatpush2.msra.mxu0 0.0
    %1717 = vmatprep.subr.mxu0 0.0
    %1718 = vmatpush2.msra.mxu0 0.0
    %1719 = vmatprep.subr.mxu0 0.0
    %1720 = vmatpush2.msra.mxu0 0.0
    %1721 = vmatprep.subr.mxu0 0.0
    %1722 = vmatpush2.msra.mxu0 0.0
    %1723 = vmatprep.subr.mxu0 0.0
    %1724 = vmatpush2.msra.mxu0 0.0
    %1725 = vmatprep.subr.mxu0 0.0
    %1726 = vmatpush2.msra.mxu0 0.0
    %1727 = vmatprep.subr.mxu0 0.0
    %1728 = vmatpush2.msra.mxu0 0.0
    %1729 = vmatprep.subr.mxu0 0.0
    %1730 = vmatpush2.msra.mxu0 0.0
    %1731 = vmatprep.subr.mxu0 0.0
    %1732 = vmatpush2.msra.mxu0 0.0
    %1733 = vmatprep.subr.mxu0 0.0
    %1734 = vmatpush2.msra.mxu0 0.0
    %1735 = vmatprep.subr.mxu0 0.0
    %1736 = vmatpush2.msra.mxu0 0.0
    %1737 = vmatprep.mubr.f32.mxu0 0.0
    %1738 = vmatmul.mubr.f32.gmra.mxu0 %v1671
    %v1739 = vpop.f32.mrf.mxu0
    %v1740 = vadd.f32 %v1668, %v1739
    %v1741 = vpop.f32.mrf.mxu0
    %1742 = vdwg.mxu0
    %vm1743 = vcmask 1041408
    %v1744 = vsel %vm1743, %v1740, -inf
    %1745 = vmax.xlane.f32.xlu0 %v1744
    %v1746 = vpop.xlane.xlu0 %1745
    %v1747 = vsub.f32 %v1740, %v1746
    %v1748 = vmul.f32 %v1747, 1.442695
    %v1749 = vpow.pop %v1748
    %v1750 = vsel %vm1743, %v1749, 0.0
    %1751 = vadd.xlane.f32.xlu0 %v1750
    %v1752 = vpop.xlane.xlu0 %1751
    %v1753 = vlog2.pop %v1752
    %v1754 = vmul.f32 %v1753, 0.6931472
    %v1755 = vsub.f32 %v1747, %v1754
    %1756 = vst [vmem:[#allocation8] sm:$0x3] %v1755
    // Predicated region
    $region30: #{tpu_custom_call.1} parent=1 // pred_check
      _
    $region31: #{tpu_custom_call.1} parent=1 // pred_check_branch
      %1758 = sbr.rel (0) target = $region33
    $region32: #{tpu_custom_call.1} parent=1 // pred_region
      %s1760 = ssub.s32 32, 32
      %1761 = vsyncadd [#allocation4], %s1760
      %s1763 = sshll.u32 [#allocation8], 4
      %s1764 = int_to_ptr.vmem [resolvable:$true] %s1763
      %1766 = dma.vmem_to_hbm [thread:$0]  %s1764, 32, %s4, [#allocation4]
    $region33: #{tpu_custom_call.1} parent=1 // pred_fallthru
      _
    // Predicated region
    $region34: #{tpu_custom_call.1} parent=1 // pred_check
      _
    $region35: #{tpu_custom_call.1} parent=1 // pred_check_branch
      %1768 = sbr.rel (0) target = $region37
    $region36: #{tpu_custom_call.1} parent=1 // pred_region
      %1769 = dma.done [#allocation4], 32
    $region37: #{tpu_custom_call.1} parent=1 // pred_fallthru
      _
    %1770 = vsyncpa [#allocation3], 1
    %1771 = vsyncpa [#allocation6], 1
    %1772 = vsyncpa [#allocation4], 1

</llo_original>
